<compile_context>
chip_gen: v6e
topology: v6e:2x2x1
jax: 0.10.0
libtpu: 0.0.40
codegen_flags: <defaults>
</compile_context>

<pallas_src>
import math

import numpy as np
import jax
import jax.numpy as jnp
from jax.experimental import pallas as pl
from jax.experimental.pallas import tpu as pltpu


# ----------------------------------------------------------------------------
# Fused kernel: 3 node embedders + masked pooling + context/query projection +
#               candidate logits + softmax/renorm + entropy/mode/log-prob
# ----------------------------------------------------------------------------
def make_fused_kernel(BB, NB, NI, NC, E, d_bin, d_item, d_pos, OUT_W, tanh_clipping, temp):
    G = NB + NI + NC
    inv_sqrt_d = 1.0 / math.sqrt(E)          # n_heads == 1 -> key_size == E
    scale = tanh_clipping / temp              # tanh clip and 1/temp folded together
    pad_w = OUT_W - (E + NC + 3)

    def kernel(x_ref, fmask_ref, vmask_ref,
               w1b_ref, b1b_ref, w2b_ref, b2b_ref,
               w1i_ref, b1i_ref, w2i_ref, b2i_ref,
               w1p_ref, b1p_ref, w2p_ref, b2p_ref,
               wcat_ref, out_ref):

        def embed(x2d, w1_ref, b1_ref, w2_ref, b2_ref):
            # Linear -> LeakyReLU(0.01) -> Linear (normFactor already folded into w1)
            h = jnp.dot(x2d, w1_ref[...], preferred_element_type=jnp.float32) + b1_ref[...]
            h = jnp.where(h > 0, h, 0.01 * h)
            return jnp.dot(h, w2_ref[...], preferred_element_type=jnp.float32) + b2_ref[...]

        x = x_ref[...]                                            # (BB, G, D) raw observation
        fm = fmask_ref[...]                                       # (BB, G), 1 = valid node

        # ---- three per-node-type MLPs against statically sliced obs columns ----------
        eb = embed(x[:, 0:NB, 0:d_bin].reshape(BB * NB, d_bin),
                   w1b_ref, b1b_ref, w2b_ref, b2b_ref).reshape(BB, NB, E)
        ei = embed(x[:, NB:NB + NI, 0:d_item].reshape(BB * NI, d_item),
                   w1i_ref, b1i_ref, w2i_ref, b2i_ref).reshape(BB, NI, E)
        ep = embed(x[:, NB + NI:G, 0:d_pos].reshape(BB * NC, d_pos),
                   w1p_ref, b1p_ref, w2p_ref, b2p_ref).reshape(BB, NC, E)

        # ---- masked graph pooling (== transEmbedding[full_mask] = 0; sum / valid_len) --
        eb_m = eb * fm[:, 0:NB, None]
        ei_m = ei * fm[:, NB:NB + NI, None]
        ep_m = ep * fm[:, NB + NI:G, None]                        # also the candidate K rows

        vlen = jnp.sum(fm, axis=1, keepdims=True)                 # (BB, 1)
        vlen = jnp.maximum(vlen, 1.0)                             # guard: all-masked row (orig NaNs)
        graph_embed = (jnp.sum(eb_m, axis=1) + jnp.sum(ei_m, axis=1)
                       + jnp.sum(ep_m, axis=1)) / vlen            # (BB, E)

        # ---- fused context + query projection: [ctx | q2] = graph_embed @ [Wctx | Wctx Wk^T]
        cq = jnp.dot(graph_embed, wcat_ref[...], preferred_element_type=jnp.float32)  # (BB, 2E)
        ctx = cq[:, 0:E]                                          # returned hidden
        q2 = cq[:, E:2 * E]

        # ---- candidate logits only: VPU multiply + lane reduce over E --------------------
        compat = jnp.sum(ep_m * q2[:, None, :], axis=-1)          # (BB, NC)
        logits = jnp.tanh(compat * inv_sqrt_d) * scale

        # ---- softmax -> invalid-mask renorm -> entropy / mode / log-prob -----------------
        m = jnp.max(logits, axis=-1, keepdims=True)
        ex = jnp.exp(logits - m)
        prob0 = ex * pl.reciprocal(jnp.sum(ex, axis=-1, keepdims=True), approx=True)
        masked = prob0 * vmask_ref[...] + 1e-20                   # vmask: 1 = allowed action
        z = jnp.sum(masked, axis=-1, keepdims=True)
        prob = masked / z                                         # renormalised probs
        logprob = jnp.log(masked) - jnp.log(z)                    # == log(prob), one log pass
        entropy = -jnp.sum(prob * logprob, axis=-1, keepdims=True)

        lmax = jnp.max(logprob, axis=-1, keepdims=True)           # log-prob of the mode
        idx = jax.lax.broadcasted_iota(jnp.int32, logprob.shape, 1)
        act = jnp.min(jnp.where(logprob == lmax, idx, NC), axis=-1, keepdims=True)
        act = jnp.minimum(act, NC - 1).astype(jnp.float32)        # keep in range (NaN guard)

        # ---- ONE lane-dense (BB, OUT_W) store: [ctx | probs | entropy | action | logp | 0] -
        parts = [ctx, prob, entropy, act, lmax]
        if pad_w > 0:
            parts.append(jnp.zeros((BB, pad_w), jnp.float32))
        out_ref[...] = jnp.concatenate(parts, axis=-1)

    return kernel


def _choose_bb(B, G, D, NC, OUT_W):
    """Largest batch tile that (a) keeps blocks legal ((BB == B) or (BB % 8 == 0)) and
    (b) keeps the double-buffered per-block working set under ~8 MiB (safe on every
    generation's default scoped VMEM).  Prefer exactly 2 grid steps for v7x's two
    TensorCores only when each half still gives the fused matmuls >= 256 rows."""
    per_row = (G * D + G + NC + OUT_W) * 4 * 2          # f32, x2 double buffering
    budget = 8 << 20
    cands = [d for d in range(1, B + 1) if B % d == 0 and (d == B or d % 8 == 0)]
    fits = [d for d in cands if d * per_row <= budget] or [min(cands)]
    half = B // 2
    if B % 2 == 0 and half in fits and half * G >= 256:
        return half
    return max(fits)


def fused_forward(obs, fmask, vmask, weights, *, NB, NI, NC, E, tanh_clipping, temp):
    B, G, D = obs.shape
    OUT_W = ((E + NC + 3 + 127) // 128) * 128
    BB = _choose_bb(B, G, D, NC, OUT_W)
    kernel = make_fused_kernel(BB, NB, NI, NC, E, D - 2, D - 5, D - 1, OUT_W,
                               tanh_clipping, temp)

    wspecs = [pl.BlockSpec(w.shape, lambda i: (0, 0)) for w in weights]
    return pl.pallas_call(
        kernel,
        grid=(B // BB,),
        in_specs=[
            pl.BlockSpec((BB, G, D), lambda i: (i, 0, 0)),   # raw observation
            pl.BlockSpec((BB, G), lambda i: (i, 0)),         # node mask (1 = valid)
            pl.BlockSpec((BB, NC), lambda i: (i, 0)),        # action mask (1 = allowed)
            *wspecs,
        ],
        out_specs=pl.BlockSpec((BB, OUT_W), lambda i: (i, 0)),
        out_shape=jax.ShapeDtypeStruct((B, OUT_W), jnp.float32),
        compiler_params=pltpu.CompilerParams(dimension_semantics=("parallel",)),
    )(obs, fmask, vmask, *weights)


# ----------------------------------------------------------------------------
# Parameters
# ----------------------------------------------------------------------------
def init_params(key, node_dim, embedding_size):
    ks = jax.random.split(key, 10)

    def lin(k, din, dout, scale=0.1):
        return jax.random.normal(k, (din, dout), jnp.float32) * scale

    return {
        # init_bin_node_embed: Linear(node_dim-2, 32) -> LeakyReLU -> Linear(32, E)
        "bin_w1": lin(ks[0], node_dim - 2, 32), "bin_b1": jnp.zeros((32,), jnp.float32),
        "bin_w2": lin(ks[1], 32, embedding_size), "bin_b2": jnp.zeros((embedding_size,), jnp.float32),
        # init_next_item_embed: Linear(node_dim-5, 32) -> LeakyReLU -> Linear(32, E)
        "item_w1": lin(ks[2], node_dim - 5, 32), "item_b1": jnp.zeros((32,), jnp.float32),
        "item_w2": lin(ks[3], 32, embedding_size), "item_b2": jnp.zeros((embedding_size,), jnp.float32),
        # init_candidate_pos_embed: Linear(node_dim-1, 32) -> LeakyReLU -> Linear(32, E)
        "pos_w1": lin(ks[4], node_dim - 1, 32), "pos_b1": jnp.zeros((32,), jnp.float32),
        "pos_w2": lin(ks[5], 32, embedding_size), "pos_b2": jnp.zeros((embedding_size,), jnp.float32),
        # project_node_embeddings: Linear(E, 3E, bias=False)
        "w_nodes": lin(ks[6], embedding_size, 3 * embedding_size),
        # project_fixed_context: Linear(E, E, bias=False)
        "w_ctx": lin(ks[7], embedding_size, embedding_size),
    }


# ----------------------------------------------------------------------------
# Forward glue (wrapper-side work is just weight prep + dtype casts; could be cached)
# ----------------------------------------------------------------------------
def attention_model_forward(params, obs, full_mask_obs, valid_mask_obs,
                            bin_node_num, next_item_num, candidate_pos_num,
                            node_dim, embedding_size, tanh_clipping=10.0,
                            temp=1.0, normFactor=1.0):
    B, G, D = obs.shape
    NB, NI, NC = bin_node_num, next_item_num, candidate_pos_num
    E = embedding_size
    assert G == NB + NI + NC and D == node_dim

    nf = jnp.float32(normFactor)
    # normFactor folded into layer-1 weights; biases passed as (1, n) rows for broadcast adds
    weights = (
        params["bin_w1"] * nf,  params["bin_b1"].reshape(1, -1),
        params["bin_w2"],       params["bin_b2"].reshape(1, -1),
        params["item_w1"] * nf, params["item_b1"].reshape(1, -1),
        params["item_w2"],      params["item_b2"].reshape(1, -1),
        params["pos_w1"] * nf,  params["pos_b1"].reshape(1, -1),
        params["pos_w2"],       params["pos_b2"].reshape(1, -1),
        # [ctx | q2] = graph_embed @ [Wctx | Wctx @ Wk^T]  (only glimpse_K of
        # project_node_embeddings is consumed; folded into the query)
        jnp.concatenate([params["w_ctx"],
                         params["w_ctx"] @ params["w_nodes"][:, :E].T], axis=1),
    )

    # TODO(synk): GraphAttentionEncoder is not part of the provided source -> identity pass-through.
    slab = fused_forward(obs.astype(jnp.float32),
                         full_mask_obs.astype(jnp.float32),       # 1 = valid node (no negation)
                         valid_mask_obs.astype(jnp.float32),      # 1 = allowed action
                         weights, NB=NB, NI=NI, NC=NC, E=E,
                         tanh_clipping=tanh_clipping, temp=temp)

    hidden = slab[:, 0:E]
    probs = slab[:, E:E + NC]
    entropy = slab[:, E + NC:E + NC + 1]
    action = slab[:, E + NC + 1:E + NC + 2].astype(jnp.int32)     # exact for NC < 2^24
    action_log_prob = slab[:, E + NC + 2:E + NC + 3]
    return action_log_prob, action, entropy, probs, hidden


# ----------------------------------------------------------------------------
# Pure-JAX reference (mirrors the PyTorch forward) for numerical validation
# ----------------------------------------------------------------------------
def reference_forward(params, obs, full_mask_obs, valid_mask_obs,
                      bin_node_num, next_item_num, candidate_pos_num,
                      node_dim, embedding_size, tanh_clipping=10.0,
                      temp=1.0, normFactor=1.0):
    B, G, D = obs.shape
    NB, NI, NC = bin_node_num, next_item_num, candidate_pos_num
    E = embedding_size

    def mlp(x, w1, b1, w2, b2):
        h = x @ w1 + b1
        h = jnp.where(h > 0, h, 0.01 * h)
        return h @ w2 + b2

    bin_e = mlp((obs[:, :NB, :D - 2] * normFactor).reshape(B * NB, D - 2),
                params["bin_w1"], params["bin_b1"],
                params["bin_w2"], params["bin_b2"]).reshape(B, NB, E)
    item_e = mlp((obs[:, NB:NB + NI, :D - 5] * normFactor).reshape(B * NI, D - 5),
                 params["item_w1"], params["item_b1"],
                 params["item_w2"], params["item_b2"]).reshape(B, NI, E)
    pos_e = mlp((obs[:, NB + NI:, :D - 1] * normFactor).reshape(B * NC, D - 1),
                params["pos_w1"], params["pos_b1"],
                params["pos_w2"], params["pos_b2"]).reshape(B, NC, E)
    emb = jnp.concatenate([bin_e, item_e, pos_e], axis=1)         # (B, G, E)

    keep = full_mask_obs                                          # 1 = valid node
    emb_m = emb * keep[:, :, None]
    graph_embed = emb_m.sum(1) / keep.sum(1, keepdims=True)
    ctx = graph_embed @ params["w_ctx"]
    K = (emb_m.reshape(B * G, E) @ params["w_nodes"][:, :E]).reshape(B, G, E)
    compat = (ctx[:, None, :] * K).sum(-1) / math.sqrt(E)
    logits = jnp.tanh(compat) * tanh_clipping
    logits = logits[:, NB + NI:] / temp
    logits = logits - jax.nn.logsumexp(logits, axis=-1, keepdims=True)
    prob0 = jnp.exp(logits)
    masked = prob0 * valid_mask_obs + 1e-20
    prob = masked / masked.sum(-1, keepdims=True)
    logp = jnp.log(prob)
    ent = -(prob * logp).sum(-1, keepdims=True)
    act = jnp.argmax(prob, axis=-1, keepdims=True).astype(jnp.int32)
    alp = jnp.max(logp, axis=-1, keepdims=True)
    return alp, act, ent, prob, ctx


# ----------------------------------------------------------------------------
if __name__ == "__main__":
    bin_node_num, next_item_num, candidate_pos_num = 4, 1, 3
    node_dim = 6
    embedding_size = 32
    batch = 2
    graph_size = bin_node_num + next_item_num + candidate_pos_num  # 8

    key = jax.random.PRNGKey(0)
    k_obs, k_par = jax.random.split(key)
    obs = jax.random.uniform(k_obs, (batch, graph_size, node_dim), jnp.float32)

    # full_mask: 1 = node present/valid (mask one node of batch 1 to exercise pooling)
    full_mask_obs = jnp.ones((batch, graph_size), jnp.float32)
    full_mask_obs = full_mask_obs.at[1, graph_size - 1].set(0.0)
    # valid_mask over candidate positions: 1 = action allowed
    valid_mask_obs = jnp.ones((batch, candidate_pos_num), jnp.float32)
    valid_mask_obs = valid_mask_obs.at[1, candidate_pos_num - 1].set(0.0)

    params = init_params(k_par, node_dim, embedding_size)

    fwd = jax.jit(lambda p, o, fm, vm: attention_model_forward(
        p, o, fm, vm, bin_node_num, next_item_num, candidate_pos_num,
        node_dim, embedding_size, tanh_clipping=10.0, temp=1.0, normFactor=1.0))

    outs = jax.block_until_ready(fwd(params, obs, full_mask_obs, valid_mask_obs))
    action_log_prob, action, entropy, probs, hidden = outs

    # validate the fused kernel against a straightforward plain-JAX port
    ref = reference_forward(params, obs, full_mask_obs, valid_mask_obs,
                            bin_node_num, next_item_num, candidate_pos_num,
                            node_dim, embedding_size, 10.0, 1.0, 1.0)
    r_alp, r_act, r_ent, r_probs, r_hidden = [np.asarray(t) for t in ref]

    assert probs.shape == (batch, candidate_pos_num)
    assert hidden.shape == (batch, embedding_size)
    assert action.shape == (batch, 1) and entropy.shape == (batch, 1)
    np.testing.assert_allclose(np.asarray(probs), r_probs, rtol=1e-3, atol=1e-4)
    np.testing.assert_allclose(np.asarray(entropy), r_ent, rtol=1e-3, atol=1e-4)
    np.testing.assert_allclose(np.asarray(hidden), r_hidden, rtol=1e-3, atol=1e-4)
    np.testing.assert_allclose(np.asarray(action_log_prob), r_alp, rtol=1e-3, atol=1e-4)
    assert np.array_equal(np.asarray(action), r_act)
    print("KERNEL_OK")
</pallas_src>

<mosaic_0001>
module attributes {stable_mosaic.version = 11 : i64} {
  func.func @kernel(%arg0: i32, %arg1: memref<2x8x6xf32, #tpu.memory_space<vmem>>, %arg2: memref<2x8xf32, #tpu.memory_space<vmem>>, %arg3: memref<2x3xf32, #tpu.memory_space<vmem>>, %arg4: memref<4x32xf32, #tpu.memory_space<vmem>>, %arg5: memref<1x32xf32, #tpu.memory_space<vmem>>, %arg6: memref<32x32xf32, #tpu.memory_space<vmem>>, %arg7: memref<1x32xf32, #tpu.memory_space<vmem>>, %arg8: memref<1x32xf32, #tpu.memory_space<vmem>>, %arg9: memref<1x32xf32, #tpu.memory_space<vmem>>, %arg10: memref<32x32xf32, #tpu.memory_space<vmem>>, %arg11: memref<1x32xf32, #tpu.memory_space<vmem>>, %arg12: memref<5x32xf32, #tpu.memory_space<vmem>>, %arg13: memref<1x32xf32, #tpu.memory_space<vmem>>, %arg14: memref<32x32xf32, #tpu.memory_space<vmem>>, %arg15: memref<1x32xf32, #tpu.memory_space<vmem>>, %arg16: memref<32x64xf32, #tpu.memory_space<vmem>>, %arg17: memref<2x128xf32, #tpu.memory_space<vmem>>) attributes {dimension_semantics = [#tpu.dimension_semantics<parallel>], iteration_bounds = array<i64: 1>, scalar_prefetch = 0 : i64, scratch_operands = 0 : i64, tpu.core_type = #tpu.core_type<tc>, window_params = [{transform_indices = @transform_0, window_bounds = array<i64: 2, 8, 6>}, {transform_indices = @transform_1, window_bounds = array<i64: 2, 8>}, {transform_indices = @transform_2, window_bounds = array<i64: 2, 3>}, {pipeline_mode = #tpu.pipeline_mode<synchronous>, transform_indices = @transform_3, window_bounds = array<i64: 4, 32>}, {pipeline_mode = #tpu.pipeline_mode<synchronous>, transform_indices = @transform_4, window_bounds = array<i64: 1, 32>}, {pipeline_mode = #tpu.pipeline_mode<synchronous>, transform_indices = @transform_5, window_bounds = array<i64: 32, 32>}, {pipeline_mode = #tpu.pipeline_mode<synchronous>, transform_indices = @transform_6, window_bounds = array<i64: 1, 32>}, {pipeline_mode = #tpu.pipeline_mode<synchronous>, transform_indices = @transform_7, window_bounds = array<i64: 1, 32>}, {pipeline_mode = #tpu.pipeline_mode<synchronous>, transform_indices = @transform_8, window_bounds = array<i64: 1, 32>}, {pipeline_mode = #tpu.pipeline_mode<synchronous>, transform_indices = @transform_9, window_bounds = array<i64: 32, 32>}, {pipeline_mode = #tpu.pipeline_mode<synchronous>, transform_indices = @transform_10, window_bounds = array<i64: 1, 32>}, {pipeline_mode = #tpu.pipeline_mode<synchronous>, transform_indices = @transform_11, window_bounds = array<i64: 5, 32>}, {pipeline_mode = #tpu.pipeline_mode<synchronous>, transform_indices = @transform_12, window_bounds = array<i64: 1, 32>}, {pipeline_mode = #tpu.pipeline_mode<synchronous>, transform_indices = @transform_13, window_bounds = array<i64: 32, 32>}, {pipeline_mode = #tpu.pipeline_mode<synchronous>, transform_indices = @transform_14, window_bounds = array<i64: 1, 32>}, {pipeline_mode = #tpu.pipeline_mode<synchronous>, transform_indices = @transform_15, window_bounds = array<i64: 32, 64>}, {transform_indices = @transform_16, window_bounds = array<i64: 2, 128>}]} {
    %c0 = arith.constant 0 : index
    %c0_0 = arith.constant 0 : index
    %c0_1 = arith.constant 0 : index
    %0 = vector.load %arg1[%c0, %c0_0, %c0_1] : memref<2x8x6xf32, #tpu.memory_space<vmem>>, vector<2x8x6xf32>
    %c0_2 = arith.constant 0 : index
    %c0_3 = arith.constant 0 : index
    %1 = vector.load %arg2[%c0_2, %c0_3] : memref<2x8xf32, #tpu.memory_space<vmem>>, vector<2x8xf32>
    %2 = vector.extract_strided_slice %0 {offsets = [0, 0, 0], sizes = [2, 4, 4], strides = [1, 1, 1]} : vector<2x8x6xf32> to vector<2x4x4xf32>
    %3 = vector.shape_cast %2 : vector<2x4x4xf32> to vector<8x4xf32>
    %c0_4 = arith.constant 0 : index
    %c0_5 = arith.constant 0 : index
    %4 = vector.load %arg4[%c0_4, %c0_5] : memref<4x32xf32, #tpu.memory_space<vmem>>, vector<4x32xf32>
    %cst = arith.constant dense<0.000000e+00> : vector<8x32xf32>
    %5 = tpu.matmul %3, %4, %cst {dimension_numbers = #tpu.dot_dimension_numbers<[1], [0], [0], [1], [0, 0, 1, 1], [], []>} : vector<8x4xf32>, vector<4x32xf32>, vector<8x32xf32> -> vector<8x32xf32>
    %c0_6 = arith.constant 0 : index
    %c0_7 = arith.constant 0 : index
    %6 = vector.load %arg5[%c0_6, %c0_7] : memref<1x32xf32, #tpu.memory_space<vmem>>, vector<1x32xf32>
    %7 = vector.broadcast %6 : vector<1x32xf32> to vector<8x32xf32>
    %8 = arith.addf %5, %7 : vector<8x32xf32>
    %cst_8 = arith.constant 0.000000e+00 : f32
    %9 = vector.broadcast %cst_8 : f32 to vector<8x32xf32>
    %10 = arith.cmpf ogt, %8, %9 : vector<8x32xf32>
    %cst_9 = arith.constant 0.00999999977 : f32
    %11 = vector.broadcast %cst_9 : f32 to vector<8x32xf32>
    %12 = arith.mulf %11, %8 : vector<8x32xf32>
    %13 = arith.select %10, %8, %12 : vector<8x32xi1>, vector<8x32xf32>
    %c0_10 = arith.constant 0 : index
    %c0_11 = arith.constant 0 : index
    %14 = vector.load %arg6[%c0_10, %c0_11] : memref<32x32xf32, #tpu.memory_space<vmem>>, vector<32x32xf32>
    %cst_12 = arith.constant dense<0.000000e+00> : vector<8x32xf32>
    %15 = tpu.matmul %13, %14, %cst_12 {dimension_numbers = #tpu.dot_dimension_numbers<[1], [0], [0], [1], [0, 0, 1, 1], [], []>} : vector<8x32xf32>, vector<32x32xf32>, vector<8x32xf32> -> vector<8x32xf32>
    %c0_13 = arith.constant 0 : index
    %c0_14 = arith.constant 0 : index
    %16 = vector.load %arg7[%c0_13, %c0_14] : memref<1x32xf32, #tpu.memory_space<vmem>>, vector<1x32xf32>
    %17 = vector.broadcast %16 : vector<1x32xf32> to vector<8x32xf32>
    %18 = arith.addf %15, %17 : vector<8x32xf32>
    %19 = vector.shape_cast %18 : vector<8x32xf32> to vector<2x4x32xf32>
    %20 = vector.extract_strided_slice %0 {offsets = [0, 4, 0], sizes = [2, 1, 1], strides = [1, 1, 1]} : vector<2x8x6xf32> to vector<2x1x1xf32>
    %21 = vector.shape_cast %20 : vector<2x1x1xf32> to vector<2x1xf32>
    %c0_15 = arith.constant 0 : index
    %c0_16 = arith.constant 0 : index
    %22 = vector.load %arg8[%c0_15, %c0_16] : memref<1x32xf32, #tpu.memory_space<vmem>>, vector<1x32xf32>
    %cst_17 = arith.constant dense<0.000000e+00> : vector<2x32xf32>
    %23 = tpu.matmul %21, %22, %cst_17 {dimension_numbers = #tpu.dot_dimension_numbers<[1], [0], [0], [1], [0, 0, 1, 1], [], []>} : vector<2x1xf32>, vector<1x32xf32>, vector<2x32xf32> -> vector<2x32xf32>
    %c0_18 = arith.constant 0 : index
    %c0_19 = arith.constant 0 : index
    %24 = vector.load %arg9[%c0_18, %c0_19] : memref<1x32xf32, #tpu.memory_space<vmem>>, vector<1x32xf32>
    %25 = vector.broadcast %24 : vector<1x32xf32> to vector<2x32xf32>
    %26 = arith.addf %23, %25 : vector<2x32xf32>
    %cst_20 = arith.constant 0.000000e+00 : f32
    %27 = vector.broadcast %cst_20 : f32 to vector<2x32xf32>
    %28 = arith.cmpf ogt, %26, %27 : vector<2x32xf32>
    %cst_21 = arith.constant 0.00999999977 : f32
    %29 = vector.broadcast %cst_21 : f32 to vector<2x32xf32>
    %30 = arith.mulf %29, %26 : vector<2x32xf32>
    %31 = arith.select %28, %26, %30 : vector<2x32xi1>, vector<2x32xf32>
    %c0_22 = arith.constant 0 : index
    %c0_23 = arith.constant 0 : index
    %32 = vector.load %arg10[%c0_22, %c0_23] : memref<32x32xf32, #tpu.memory_space<vmem>>, vector<32x32xf32>
    %cst_24 = arith.constant dense<0.000000e+00> : vector<2x32xf32>
    %33 = tpu.matmul %31, %32, %cst_24 {dimension_numbers = #tpu.dot_dimension_numbers<[1], [0], [0], [1], [0, 0, 1, 1], [], []>} : vector<2x32xf32>, vector<32x32xf32>, vector<2x32xf32> -> vector<2x32xf32>
    %c0_25 = arith.constant 0 : index
    %c0_26 = arith.constant 0 : index
    %34 = vector.load %arg11[%c0_25, %c0_26] : memref<1x32xf32, #tpu.memory_space<vmem>>, vector<1x32xf32>
    %35 = vector.broadcast %34 : vector<1x32xf32> to vector<2x32xf32>
    %36 = arith.addf %33, %35 : vector<2x32xf32>
    %37 = vector.shape_cast %36 : vector<2x32xf32> to vector<2x1x32xf32>
    %38 = vector.extract_strided_slice %0 {offsets = [0, 5, 0], sizes = [2, 3, 5], strides = [1, 1, 1]} : vector<2x8x6xf32> to vector<2x3x5xf32>
    %39 = vector.shape_cast %38 : vector<2x3x5xf32> to vector<6x5xf32>
    %c0_27 = arith.constant 0 : index
    %c0_28 = arith.constant 0 : index
    %40 = vector.load %arg12[%c0_27, %c0_28] : memref<5x32xf32, #tpu.memory_space<vmem>>, vector<5x32xf32>
    %cst_29 = arith.constant dense<0.000000e+00> : vector<6x32xf32>
    %41 = tpu.matmul %39, %40, %cst_29 {dimension_numbers = #tpu.dot_dimension_numbers<[1], [0], [0], [1], [0, 0, 1, 1], [], []>} : vector<6x5xf32>, vector<5x32xf32>, vector<6x32xf32> -> vector<6x32xf32>
    %c0_30 = arith.constant 0 : index
    %c0_31 = arith.constant 0 : index
    %42 = vector.load %arg13[%c0_30, %c0_31] : memref<1x32xf32, #tpu.memory_space<vmem>>, vector<1x32xf32>
    %43 = vector.broadcast %42 : vector<1x32xf32> to vector<6x32xf32>
    %44 = arith.addf %41, %43 : vector<6x32xf32>
    %cst_32 = arith.constant 0.000000e+00 : f32
    %45 = vector.broadcast %cst_32 : f32 to vector<6x32xf32>
    %46 = arith.cmpf ogt, %44, %45 : vector<6x32xf32>
    %cst_33 = arith.constant 0.00999999977 : f32
    %47 = vector.broadcast %cst_33 : f32 to vector<6x32xf32>
    %48 = arith.mulf %47, %44 : vector<6x32xf32>
    %49 = arith.select %46, %44, %48 : vector<6x32xi1>, vector<6x32xf32>
    %c0_34 = arith.constant 0 : index
    %c0_35 = arith.constant 0 : index
    %50 = vector.load %arg14[%c0_34, %c0_35] : memref<32x32xf32, #tpu.memory_space<vmem>>, vector<32x32xf32>
    %cst_36 = arith.constant dense<0.000000e+00> : vector<6x32xf32>
    %51 = tpu.matmul %49, %50, %cst_36 {dimension_numbers = #tpu.dot_dimension_numbers<[1], [0], [0], [1], [0, 0, 1, 1], [], []>} : vector<6x32xf32>, vector<32x32xf32>, vector<6x32xf32> -> vector<6x32xf32>
    %c0_37 = arith.constant 0 : index
    %c0_38 = arith.constant 0 : index
    %52 = vector.load %arg15[%c0_37, %c0_38] : memref<1x32xf32, #tpu.memory_space<vmem>>, vector<1x32xf32>
    %53 = vector.broadcast %52 : vector<1x32xf32> to vector<6x32xf32>
    %54 = arith.addf %51, %53 : vector<6x32xf32>
    %55 = vector.shape_cast %54 : vector<6x32xf32> to vector<2x3x32xf32>
    %56 = vector.extract_strided_slice %1 {offsets = [0, 0], sizes = [2, 4], strides = [1, 1]} : vector<2x8xf32> to vector<2x4xf32>
    %57 = vector.shape_cast %56 : vector<2x4xf32> to vector<2x4x1xf32>
    %58 = vector.broadcast %57 : vector<2x4x1xf32> to vector<2x4x32xf32>
    %59 = arith.mulf %19, %58 : vector<2x4x32xf32>
    %60 = vector.extract_strided_slice %1 {offsets = [0, 4], sizes = [2, 1], strides = [1, 1]} : vector<2x8xf32> to vector<2x1xf32>
    %61 = vector.shape_cast %60 : vector<2x1xf32> to vector<2x1x1xf32>
    %62 = vector.broadcast %61 : vector<2x1x1xf32> to vector<2x1x32xf32>
    %63 = arith.mulf %37, %62 : vector<2x1x32xf32>
    %64 = vector.extract_strided_slice %1 {offsets = [0, 5], sizes = [2, 3], strides = [1, 1]} : vector<2x8xf32> to vector<2x3xf32>
    %65 = vector.shape_cast %64 : vector<2x3xf32> to vector<2x3x1xf32>
    %66 = vector.broadcast %65 : vector<2x3x1xf32> to vector<2x3x32xf32>
    %67 = arith.mulf %55, %66 : vector<2x3x32xf32>
    %cst_39 = arith.constant dense<0.000000e+00> : vector<2xf32>
    %68 = vector.multi_reduction <add>, %1, %cst_39 [1] : vector<2x8xf32> to vector<2xf32>
    %69 = vector.shape_cast %68 : vector<2xf32> to vector<2x1xf32>
    %cst_40 = arith.constant 1.000000e+00 : f32
    %70 = vector.broadcast %cst_40 : f32 to vector<2x1xf32>
    %71 = arith.maximumf %69, %70 : vector<2x1xf32>
    %cst_41 = arith.constant dense<0.000000e+00> : vector<2x32xf32>
    %72 = vector.multi_reduction <add>, %59, %cst_41 [1] : vector<2x4x32xf32> to vector<2x32xf32>
    %cst_42 = arith.constant dense<0.000000e+00> : vector<2x32xf32>
    %73 = vector.multi_reduction <add>, %63, %cst_42 [1] : vector<2x1x32xf32> to vector<2x32xf32>
    %74 = arith.addf %72, %73 : vector<2x32xf32>
    %cst_43 = arith.constant dense<0.000000e+00> : vector<2x32xf32>
    %75 = vector.multi_reduction <add>, %67, %cst_43 [1] : vector<2x3x32xf32> to vector<2x32xf32>
    %76 = arith.addf %74, %75 : vector<2x32xf32>
    %77 = vector.broadcast %71 : vector<2x1xf32> to vector<2x32xf32>
    %78 = arith.divf %76, %77 : vector<2x32xf32>
    %c0_44 = arith.constant 0 : index
    %c0_45 = arith.constant 0 : index
    %79 = vector.load %arg16[%c0_44, %c0_45] : memref<32x64xf32, #tpu.memory_space<vmem>>, vector<32x64xf32>
    %cst_46 = arith.constant dense<0.000000e+00> : vector<2x64xf32>
    %80 = tpu.matmul %78, %79, %cst_46 {dimension_numbers = #tpu.dot_dimension_numbers<[1], [0], [0], [1], [0, 0, 1, 1], [], []>} : vector<2x32xf32>, vector<32x64xf32>, vector<2x64xf32> -> vector<2x64xf32>
    %81 = vector.extract_strided_slice %80 {offsets = [0, 0], sizes = [2, 32], strides = [1, 1]} : vector<2x64xf32> to vector<2x32xf32>
    %82 = vector.extract_strided_slice %80 {offsets = [0, 32], sizes = [2, 32], strides = [1, 1]} : vector<2x64xf32> to vector<2x32xf32>
    %83 = vector.shape_cast %82 : vector<2x32xf32> to vector<2x1x32xf32>
    %84 = vector.broadcast %83 : vector<2x1x32xf32> to vector<2x3x32xf32>
    %85 = arith.mulf %67, %84 : vector<2x3x32xf32>
    %cst_47 = arith.constant dense<0.000000e+00> : vector<2x3xf32>
    %86 = vector.multi_reduction <add>, %85, %cst_47 [2] : vector<2x3x32xf32> to vector<2x3xf32>
    %cst_48 = arith.constant 0.176776692 : f32
    %87 = vector.broadcast %cst_48 : f32 to vector<2x3xf32>
    %88 = arith.mulf %86, %87 : vector<2x3xf32>
    %89 = math.tanh %88 : vector<2x3xf32>
    %cst_49 = arith.constant 1.000000e+01 : f32
    %90 = vector.broadcast %cst_49 : f32 to vector<2x3xf32>
    %91 = arith.mulf %89, %90 : vector<2x3xf32>
    %cst_50 = arith.constant dense<0xFF800000> : vector<2xf32>
    %92 = vector.multi_reduction <maximumf>, %91, %cst_50 [1] : vector<2x3xf32> to vector<2xf32>
    %93 = vector.shape_cast %92 : vector<2xf32> to vector<2x1xf32>
    %94 = vector.broadcast %93 : vector<2x1xf32> to vector<2x3xf32>
    %95 = arith.subf %91, %94 : vector<2x3xf32>
    %96 = math.exp %95 : vector<2x3xf32>
    %cst_51 = arith.constant dense<0.000000e+00> : vector<2xf32>
    %97 = vector.multi_reduction <add>, %96, %cst_51 [1] : vector<2x3xf32> to vector<2xf32>
    %98 = vector.shape_cast %97 : vector<2xf32> to vector<2x1xf32>
    %99 = tpu.reciprocal %98 {approx = true} : vector<2x1xf32> -> vector<2x1xf32>
    %100 = vector.broadcast %99 : vector<2x1xf32> to vector<2x3xf32>
    %101 = arith.mulf %96, %100 : vector<2x3xf32>
    %c0_52 = arith.constant 0 : index
    %c0_53 = arith.constant 0 : index
    %102 = vector.load %arg3[%c0_52, %c0_53] : memref<2x3xf32, #tpu.memory_space<vmem>>, vector<2x3xf32>
    %103 = arith.mulf %101, %102 : vector<2x3xf32>
    %cst_54 = arith.constant 9.99999968E-21 : f32
    %104 = vector.broadcast %cst_54 : f32 to vector<2x3xf32>
    %105 = arith.addf %103, %104 : vector<2x3xf32>
    %cst_55 = arith.constant dense<0.000000e+00> : vector<2xf32>
    %106 = vector.multi_reduction <add>, %105, %cst_55 [1] : vector<2x3xf32> to vector<2xf32>
    %107 = vector.shape_cast %106 : vector<2xf32> to vector<2x1xf32>
    %108 = vector.broadcast %107 : vector<2x1xf32> to vector<2x3xf32>
    %109 = arith.divf %105, %108 : vector<2x3xf32>
    %110 = math.log %105 : vector<2x3xf32>
    %111 = math.log %107 : vector<2x1xf32>
    %112 = vector.broadcast %111 : vector<2x1xf32> to vector<2x3xf32>
    %113 = arith.subf %110, %112 : vector<2x3xf32>
    %114 = arith.mulf %109, %113 : vector<2x3xf32>
    %cst_56 = arith.constant dense<0.000000e+00> : vector<2xf32>
    %115 = vector.multi_reduction <add>, %114, %cst_56 [1] : vector<2x3xf32> to vector<2xf32>
    %116 = vector.shape_cast %115 : vector<2xf32> to vector<2x1xf32>
    %cst_57 = arith.constant 0.000000e+00 : f32
    %117 = vector.broadcast %cst_57 : f32 to vector<2x1xf32>
    %118 = arith.subf %117, %116 : vector<2x1xf32>
    %cst_58 = arith.constant dense<0xFF800000> : vector<2xf32>
    %119 = vector.multi_reduction <maximumf>, %113, %cst_58 [1] : vector<2x3xf32> to vector<2xf32>
    %120 = vector.shape_cast %119 : vector<2xf32> to vector<2x1xf32>
    %121 = tpu.iota {dimensions = array<i32: 1>} : vector<2x3xi32>
    %122 = vector.broadcast %120 : vector<2x1xf32> to vector<2x3xf32>
    %123 = arith.cmpf oeq, %113, %122 : vector<2x3xf32>
    %c3_i32 = arith.constant 3 : i32
    %124 = vector.broadcast %c3_i32 : i32 to vector<2x3xi32>
    %125 = arith.select %123, %121, %124 : vector<2x3xi1>, vector<2x3xi32>
    %cst_59 = arith.constant dense<2147483647> : vector<2xi32>
    %126 = vector.multi_reduction <minsi>, %125, %cst_59 [1] : vector<2x3xi32> to vector<2xi32>
    %127 = vector.shape_cast %126 : vector<2xi32> to vector<2x1xi32>
    %c2_i32 = arith.constant 2 : i32
    %128 = vector.broadcast %c2_i32 : i32 to vector<2x1xi32>
    %129 = arith.minsi %127, %128 : vector<2x1xi32>
    %130 = arith.sitofp %129 : vector<2x1xi32> to vector<2x1xf32>
    %cst_60 = arith.constant 0.000000e+00 : f32
    %131 = vector.broadcast %cst_60 : f32 to vector<2x90xf32>
    %132 = tpu.concatenate %81, %109, %118, %130, %120, %131 in 1 : vector<2x32xf32>, vector<2x3xf32>, vector<2x1xf32>, vector<2x1xf32>, vector<2x1xf32>, vector<2x90xf32> -> vector<2x128xf32>
    %c0_61 = arith.constant 0 : index
    %c0_62 = arith.constant 0 : index
    %133 = vector.load %arg17[%c0_61, %c0_62] : memref<2x128xf32, #tpu.memory_space<vmem>>, vector<2x128xf32>
    tpu.vector_store %arg17[%c0_61, %c0_62], %132 {strides = array<i32>} : memref<2x128xf32, #tpu.memory_space<vmem>>, vector<2x128xf32>,
    return
  }
  func.func @transform_0(%arg0: i32) -> (i32, i32, i32) {
    %c0_i32 = arith.constant 0 : i32
    %c0_i32_0 = arith.constant 0 : i32
    %c0_i32_1 = arith.constant 0 : i32
    return %arg0, %c0_i32, %c0_i32_0 : i32, i32, i32
  }
  func.func @transform_1(%arg0: i32) -> (i32, i32) {
    %c0_i32 = arith.constant 0 : i32
    %c0_i32_0 = arith.constant 0 : i32
    return %arg0, %c0_i32 : i32, i32
  }
  func.func @transform_2(%arg0: i32) -> (i32, i32) {
    %c0_i32 = arith.constant 0 : i32
    %c0_i32_0 = arith.constant 0 : i32
    return %arg0, %c0_i32 : i32, i32
  }
  func.func @transform_3(%arg0: i32) -> (i32, i32) {
    %c0_i32 = arith.constant 0 : i32
    %c0_i32_0 = arith.constant 0 : i32
    %c0_i32_1 = arith.constant 0 : i32
    return %c0_i32, %c0_i32_0 : i32, i32
  }
  func.func @transform_4(%arg0: i32) -> (i32, i32) {
    %c0_i32 = arith.constant 0 : i32
    %c0_i32_0 = arith.constant 0 : i32
    %c0_i32_1 = arith.constant 0 : i32
    return %c0_i32, %c0_i32_0 : i32, i32
  }
  func.func @transform_5(%arg0: i32) -> (i32, i32) {
    %c0_i32 = arith.constant 0 : i32
    %c0_i32_0 = arith.constant 0 : i32
    %c0_i32_1 = arith.constant 0 : i32
    return %c0_i32, %c0_i32_0 : i32, i32
  }
  func.func @transform_6(%arg0: i32) -> (i32, i32) {
    %c0_i32 = arith.constant 0 : i32
    %c0_i32_0 = arith.constant 0 : i32
    %c0_i32_1 = arith.constant 0 : i32
    return %c0_i32, %c0_i32_0 : i32, i32
  }
  func.func @transform_7(%arg0: i32) -> (i32, i32) {
    %c0_i32 = arith.constant 0 : i32
    %c0_i32_0 = arith.constant 0 : i32
    %c0_i32_1 = arith.constant 0 : i32
    return %c0_i32, %c0_i32_0 : i32, i32
  }
  func.func @transform_8(%arg0: i32) -> (i32, i32) {
    %c0_i32 = arith.constant 0 : i32
    %c0_i32_0 = arith.constant 0 : i32
    %c0_i32_1 = arith.constant 0 : i32
    return %c0_i32, %c0_i32_0 : i32, i32
  }
  func.func @transform_9(%arg0: i32) -> (i32, i32) {
    %c0_i32 = arith.constant 0 : i32
    %c0_i32_0 = arith.constant 0 : i32
    %c0_i32_1 = arith.constant 0 : i32
    return %c0_i32, %c0_i32_0 : i32, i32
  }
  func.func @transform_10(%arg0: i32) -> (i32, i32) {
    %c0_i32 = arith.constant 0 : i32
    %c0_i32_0 = arith.constant 0 : i32
    %c0_i32_1 = arith.constant 0 : i32
    return %c0_i32, %c0_i32_0 : i32, i32
  }
  func.func @transform_11(%arg0: i32) -> (i32, i32) {
    %c0_i32 = arith.constant 0 : i32
    %c0_i32_0 = arith.constant 0 : i32
    %c0_i32_1 = arith.constant 0 : i32
    return %c0_i32, %c0_i32_0 : i32, i32
  }
  func.func @transform_12(%arg0: i32) -> (i32, i32) {
    %c0_i32 = arith.constant 0 : i32
    %c0_i32_0 = arith.constant 0 : i32
    %c0_i32_1 = arith.constant 0 : i32
    return %c0_i32, %c0_i32_0 : i32, i32
  }
  func.func @transform_13(%arg0: i32) -> (i32, i32) {
    %c0_i32 = arith.constant 0 : i32
    %c0_i32_0 = arith.constant 0 : i32
    %c0_i32_1 = arith.constant 0 : i32
    return %c0_i32, %c0_i32_0 : i32, i32
  }
  func.func @transform_14(%arg0: i32) -> (i32, i32) {
    %c0_i32 = arith.constant 0 : i32
    %c0_i32_0 = arith.constant 0 : i32
    %c0_i32_1 = arith.constant 0 : i32
    return %c0_i32, %c0_i32_0 : i32, i32
  }
  func.func @transform_15(%arg0: i32) -> (i32, i32) {
    %c0_i32 = arith.constant 0 : i32
    %c0_i32_0 = arith.constant 0 : i32
    %c0_i32_1 = arith.constant 0 : i32
    return %c0_i32, %c0_i32_0 : i32, i32
  }
  func.func @transform_16(%arg0: i32) -> (i32, i32) {
    %c0_i32 = arith.constant 0 : i32
    %c0_i32_0 = arith.constant 0 : i32
    return %arg0, %c0_i32 : i32, i32
  }
}

</mosaic_0001>

<llo_original>
// kernel: _lambda_.1
$region0: #{_lambda_.1}
  #allocation0 [shape = 'u32[]', space=smem, size = 0x4, offset = 0x4, fixed_abs, tag = 'smem constant byte address 0x4 - core index']
  #allocation1 [shape = 'u32[144,128]{1,0:T(1,128)}', space=vmem, size = 0x12000, scoped, tag = 'internal scratch']
  %s0 = inlined_call_operand.vmem [shape: f32[2,8,6], index: 0, kind: input, shape index: {}]
  %s1 = inlined_call_operand.vmem [shape: f32[2,8], index: 1, kind: input, shape index: {}]
  %s2 = inlined_call_operand.vmem [shape: f32[2,3], index: 2, kind: input, shape index: {}]
  %s3 = inlined_call_operand.vmem [shape: f32[4,32], index: 3, kind: input, shape index: {}]
  %s4 = inlined_call_operand.vmem [shape: f32[1,32], index: 4, kind: input, shape index: {}]
  %s5 = inlined_call_operand.vmem [shape: f32[32,32], index: 5, kind: input, shape index: {}]
  %s6 = inlined_call_operand.vmem [shape: f32[1,32], index: 6, kind: input, shape index: {}]
  %s7 = inlined_call_operand.vmem [shape: f32[1,32], index: 7, kind: input, shape index: {}]
  %s8 = inlined_call_operand.vmem [shape: f32[1,32], index: 8, kind: input, shape index: {}]
  %s9 = inlined_call_operand.vmem [shape: f32[32,32], index: 9, kind: input, shape index: {}]
  %s10 = inlined_call_operand.vmem [shape: f32[1,32], index: 10, kind: input, shape index: {}]
  %s11 = inlined_call_operand.vmem [shape: f32[5,32], index: 11, kind: input, shape index: {}]
  %s12 = inlined_call_operand.vmem [shape: f32[1,32], index: 12, kind: input, shape index: {}]
  %s13 = inlined_call_operand.vmem [shape: f32[32,32], index: 13, kind: input, shape index: {}]
  %s14 = inlined_call_operand.vmem [shape: f32[1,32], index: 14, kind: input, shape index: {}]
  %s15 = inlined_call_operand.vmem [shape: f32[32,64], index: 15, kind: input, shape index: {}]
  %s16 = inlined_call_operand.vmem [shape: f32[2,128], index: 16, kind: output, shape index: {}]
  %s17 = sld [smem:[#allocation0]]
  $region74: #{_lambda_.1} parent=0
    _
  %s19 = ssub.s32 1, %s17
  %s20 = scalar_select 0, %s19, %s17
  // Predicated region
  $region2: #{_lambda_.1} parent=0 // pred_check
    _
  $region3: #{_lambda_.1} parent=0 // pred_check_branch
    %22 = sbr.rel (0) target = $region5
  $region4: #{_lambda_.1} parent=0 // pred_region
    _
  $region5: #{_lambda_.1} parent=0 // pred_fallthru
    _
  // Predicated region
  $region6: #{_lambda_.1} parent=0 // pred_check
    _
  $region7: #{_lambda_.1} parent=0 // pred_check_branch
    %24 = sbr.rel (0) target = $region9
  $region8: #{_lambda_.1} parent=0 // pred_region
    _
  $region9: #{_lambda_.1} parent=0 // pred_fallthru
    _
  // Predicated region
  $region10: #{_lambda_.1} parent=0 // pred_check
    _
  $region11: #{_lambda_.1} parent=0 // pred_check_branch
    %26 = sbr.rel (0) target = $region13
  $region12: #{_lambda_.1} parent=0 // pred_region
    _
  $region13: #{_lambda_.1} parent=0 // pred_fallthru
    _
  // Predicated region
  $region14: #{_lambda_.1} parent=0 // pred_check
    _
  $region15: #{_lambda_.1} parent=0 // pred_check_branch
    %28 = sbr.rel (0) target = $region17
  $region16: #{_lambda_.1} parent=0 // pred_region
    _
  $region17: #{_lambda_.1} parent=0 // pred_fallthru
    _
  // Predicated region
  $region18: #{_lambda_.1} parent=0 // pred_check
    _
  $region19: #{_lambda_.1} parent=0 // pred_check_branch
    %30 = sbr.rel (0) target = $region21
  $region20: #{_lambda_.1} parent=0 // pred_region
    _
  $region21: #{_lambda_.1} parent=0 // pred_fallthru
    _
  // Predicated region
  $region22: #{_lambda_.1} parent=0 // pred_check
    _
  $region23: #{_lambda_.1} parent=0 // pred_check_branch
    %32 = sbr.rel (0) target = $region25
  $region24: #{_lambda_.1} parent=0 // pred_region
    _
  $region25: #{_lambda_.1} parent=0 // pred_fallthru
    _
  // Predicated region
  $region26: #{_lambda_.1} parent=0 // pred_check
    _
  $region27: #{_lambda_.1} parent=0 // pred_check_branch
    %34 = sbr.rel (0) target = $region29
  $region28: #{_lambda_.1} parent=0 // pred_region
    _
  $region29: #{_lambda_.1} parent=0 // pred_fallthru
    _
  // Predicated region
  $region30: #{_lambda_.1} parent=0 // pred_check
    _
  $region31: #{_lambda_.1} parent=0 // pred_check_branch
    %36 = sbr.rel (0) target = $region33
  $region32: #{_lambda_.1} parent=0 // pred_region
    _
  $region33: #{_lambda_.1} parent=0 // pred_fallthru
    _
  // Predicated region
  $region34: #{_lambda_.1} parent=0 // pred_check
    _
  $region35: #{_lambda_.1} parent=0 // pred_check_branch
    %38 = sbr.rel (0) target = $region37
  $region36: #{_lambda_.1} parent=0 // pred_region
    _
  $region37: #{_lambda_.1} parent=0 // pred_fallthru
    _
  // Predicated region
  $region38: #{_lambda_.1} parent=0 // pred_check
    _
  $region39: #{_lambda_.1} parent=0 // pred_check_branch
    %40 = sbr.rel (0) target = $region41
  $region40: #{_lambda_.1} parent=0 // pred_region
    _
  $region41: #{_lambda_.1} parent=0 // pred_fallthru
    _
  // Predicated region
  $region42: #{_lambda_.1} parent=0 // pred_check
    _
  $region43: #{_lambda_.1} parent=0 // pred_check_branch
    %42 = sbr.rel (0) target = $region45
  $region44: #{_lambda_.1} parent=0 // pred_region
    _
  $region45: #{_lambda_.1} parent=0 // pred_fallthru
    _
  // Predicated region
  $region46: #{_lambda_.1} parent=0 // pred_check
    _
  $region47: #{_lambda_.1} parent=0 // pred_check_branch
    %44 = sbr.rel (0) target = $region49
  $region48: #{_lambda_.1} parent=0 // pred_region
    _
  $region49: #{_lambda_.1} parent=0 // pred_fallthru
    _
  // Predicated region
  $region50: #{_lambda_.1} parent=0 // pred_check
    _
  $region51: #{_lambda_.1} parent=0 // pred_check_branch
    %46 = sbr.rel (0) target = $region53
  $region52: #{_lambda_.1} parent=0 // pred_region
    _
  $region53: #{_lambda_.1} parent=0 // pred_fallthru
    _
  // Predicated region
  $region54: #{_lambda_.1} parent=0 // pred_check
    _
  $region55: #{_lambda_.1} parent=0 // pred_check_branch
    %48 = sbr.rel (0) target = $region57
  $region56: #{_lambda_.1} parent=0 // pred_region
    _
  $region57: #{_lambda_.1} parent=0 // pred_fallthru
    _
  // Predicated region
  $region58: #{_lambda_.1} parent=0 // pred_check
    _
  $region59: #{_lambda_.1} parent=0 // pred_check_branch
    %50 = sbr.rel (0) target = $region61
  $region60: #{_lambda_.1} parent=0 // pred_region
    _
  $region61: #{_lambda_.1} parent=0 // pred_fallthru
    _
  // Predicated region
  $region62: #{_lambda_.1} parent=0 // pred_check
    _
  $region63: #{_lambda_.1} parent=0 // pred_check_branch
    %52 = sbr.rel (0) target = $region65
  $region64: #{_lambda_.1} parent=0 // pred_region
    _
  $region65: #{_lambda_.1} parent=0 // pred_fallthru
    _
  %v53 = vld [vmem:[%s0] sm:$0xff]
  %v54 = vld [vmem:[%s0 + $0x8] sm:$0xff]
  %v55 = vld [vmem:[%s1] sm:$0x3]
  %v56 = vld [vmem:[%s3] sm:$0xf]
  %v57 = vld [vmem:[%s4] sm:$0x1]
  %v59 = vlaneseq
  %v60 = vshrl.u32 %v59, 7
  %v61 = vsub.s32 0, %v60
  %v62 = vrot.slane %v57, %v61
  %v66 = vcombine.low %v53, %v54
  %vm67 = vcmask 31744
  %v68 = vsel %vm67, %v66, 0
  %vm70 = vcmask 1043456
  %v72 = vsel %vm70, %v56, 0
  %74 = vmatprep.subr.mxu0 0.0
  %75 = vmatpush1.msra.mxu0 0.0
  %76 = vmatprep.subr.mxu0 0.0
  %77 = vmatpush1.msra.mxu0 0.0
  %78 = vmatprep.subr.mxu0 0.0
  %79 = vmatpush1.msra.mxu0 0.0
  %80 = vmatprep.subr.mxu0 0.0
  %81 = vmatpush1.msra.mxu0 0.0
  %82 = vmatprep.subr.mxu0 0.0
  %83 = vmatpush1.msra.mxu0 0.0
  %84 = vmatprep.subr.mxu0 0.0
  %85 = vmatpush1.msra.mxu0 0.0
  %86 = vmatprep.subr.mxu0 0.0
  %87 = vmatpush1.msra.mxu0 0.0
  %88 = vmatprep.subr.mxu0 0.0
  %89 = vmatpush1.msra.mxu0 0.0
  %90 = vmatprep.subr.mxu0 0.0
  %91 = vmatpush1.msra.mxu0 0.0
  %92 = vmatprep.subr.mxu0 0.0
  %93 = vmatpush1.msra.mxu0 0.0
  %94 = vmatprep.subr.mxu0 0.0
  %95 = vmatpush1.msra.mxu0 0.0
  %96 = vmatprep.subr.mxu0 0.0
  %97 = vmatpush1.msra.mxu0 0.0
  %98 = vmatprep.subr.mxu0 0.0
  %99 = vmatpush1.msra.mxu0 0.0
  %100 = vmatprep.subr.mxu0 0.0
  %101 = vmatpush1.msra.mxu0 0.0
  %102 = vmatprep.subr.mxu0 0.0
  %103 = vmatpush1.msra.mxu0 0.0
  %104 = vmatprep.subr.mxu0 0.0
  %105 = vmatpush1.msra.mxu0 %v72
  %106 = vmatprep.subr.mxu0 0.0
  %107 = vmatpush2.msra.mxu0 0.0
  %108 = vmatprep.subr.mxu0 0.0
  %109 = vmatpush2.msra.mxu0 0.0
  %110 = vmatprep.subr.mxu0 0.0
  %111 = vmatpush2.msra.mxu0 0.0
  %112 = vmatprep.subr.mxu0 0.0
  %113 = vmatpush2.msra.mxu0 0.0
  %114 = vmatprep.subr.mxu0 0.0
  %115 = vmatpush2.msra.mxu0 0.0
  %116 = vmatprep.subr.mxu0 0.0
  %117 = vmatpush2.msra.mxu0 0.0
  %118 = vmatprep.subr.mxu0 0.0
  %119 = vmatpush2.msra.mxu0 0.0
  %120 = vmatprep.subr.mxu0 0.0
  %121 = vmatpush2.msra.mxu0 0.0
  %122 = vmatprep.subr.mxu0 0.0
  %123 = vmatpush2.msra.mxu0 0.0
  %124 = vmatprep.subr.mxu0 0.0
  %125 = vmatpush2.msra.mxu0 0.0
  %126 = vmatprep.subr.mxu0 0.0
  %127 = vmatpush2.msra.mxu0 0.0
  %128 = vmatprep.subr.mxu0 0.0
  %129 = vmatpush2.msra.mxu0 0.0
  %130 = vmatprep.subr.mxu0 0.0
  %131 = vmatpush2.msra.mxu0 0.0
  %132 = vmatprep.subr.mxu0 0.0
  %133 = vmatpush2.msra.mxu0 0.0
  %134 = vmatprep.subr.mxu0 0.0
  %135 = vmatpush2.msra.mxu0 0.0
  %136 = vmatprep.subr.mxu0 0.0
  %137 = vmatpush2.msra.mxu0 0.0
  %138 = vmatprep.mubr.f32.mxu0 0.0
  %139 = vmatmul.mubr.f32.gmra.mxu0 %v68
  %v140 = vpop.f32.mrf.mxu0
  %v141 = vadd.f32 %v62, %v140
  %v142 = vpop.f32.mrf.mxu0
  %143 = vdwg.mxu0
  %vm144 = vcmp.gt.f32.partialorder %v141, 0.0
  %v145 = vmul.f32 %v141, 0.01
  %v146 = vsel %vm144, %v141, %v145
  %v147 = vld [vmem:[%s5] sm:$0xff]
  %v148 = vld [vmem:[%s5 + $0x8] sm:$0xff]
  %v149 = vld [vmem:[%s5 + $0x10] sm:$0xff]
  %v150 = vld [vmem:[%s5 + $0x18] sm:$0xff]
  %v151 = vld [vmem:[%s6] sm:$0x1]
  %v153 = vlaneseq
  %v154 = vshrl.u32 %v153, 7
  %v155 = vsub.s32 0, %v154
  %v156 = vrot.slane %v151, %v155
  %vm158 = vcmask 261120
  %v160 = vsel %vm158, %v146, 0
  %162 = vmatprep.subr.mxu0 0.0
  %163 = vmatpush1.msra.mxu0 0.0
  %164 = vmatprep.subr.mxu0 0.0
  %165 = vmatpush1.msra.mxu0 0.0
  %166 = vmatprep.subr.mxu0 0.0
  %167 = vmatpush1.msra.mxu0 0.0
  %168 = vmatprep.subr.mxu0 0.0
  %169 = vmatpush1.msra.mxu0 0.0
  %170 = vmatprep.subr.mxu0 0.0
  %171 = vmatpush1.msra.mxu0 0.0
  %172 = vmatprep.subr.mxu0 0.0
  %173 = vmatpush1.msra.mxu0 0.0
  %174 = vmatprep.subr.mxu0 0.0
  %175 = vmatpush1.msra.mxu0 0.0
  %176 = vmatprep.subr.mxu0 0.0
  %177 = vmatpush1.msra.mxu0 0.0
  %178 = vmatprep.subr.mxu0 0.0
  %179 = vmatpush1.msra.mxu0 0.0
  %180 = vmatprep.subr.mxu0 0.0
  %181 = vmatpush1.msra.mxu0 0.0
  %182 = vmatprep.subr.mxu0 0.0
  %183 = vmatpush1.msra.mxu0 0.0
  %184 = vmatprep.subr.mxu0 0.0
  %185 = vmatpush1.msra.mxu0 0.0
  %186 = vmatprep.subr.mxu0 0.0
  %187 = vmatpush1.msra.mxu0 %v150
  %188 = vmatprep.subr.mxu0 0.0
  %189 = vmatpush1.msra.mxu0 %v149
  %190 = vmatprep.subr.mxu0 0.0
  %191 = vmatpush1.msra.mxu0 %v148
  %192 = vmatprep.subr.mxu0 0.0
  %193 = vmatpush1.msra.mxu0 %v147
  %194 = vmatprep.subr.mxu0 0.0
  %195 = vmatpush2.msra.mxu0 0.0
  %196 = vmatprep.subr.mxu0 0.0
  %197 = vmatpush2.msra.mxu0 0.0
  %198 = vmatprep.subr.mxu0 0.0
  %199 = vmatpush2.msra.mxu0 0.0
  %200 = vmatprep.subr.mxu0 0.0
  %201 = vmatpush2.msra.mxu0 0.0
  %202 = vmatprep.subr.mxu0 0.0
  %203 = vmatpush2.msra.mxu0 0.0
  %204 = vmatprep.subr.mxu0 0.0
  %205 = vmatpush2.msra.mxu0 0.0
  %206 = vmatprep.subr.mxu0 0.0
  %207 = vmatpush2.msra.mxu0 0.0
  %208 = vmatprep.subr.mxu0 0.0
  %209 = vmatpush2.msra.mxu0 0.0
  %210 = vmatprep.subr.mxu0 0.0
  %211 = vmatpush2.msra.mxu0 0.0
  %212 = vmatprep.subr.mxu0 0.0
  %213 = vmatpush2.msra.mxu0 0.0
  %214 = vmatprep.subr.mxu0 0.0
  %215 = vmatpush2.msra.mxu0 0.0
  %216 = vmatprep.subr.mxu0 0.0
  %217 = vmatpush2.msra.mxu0 0.0
  %218 = vmatprep.subr.mxu0 0.0
  %219 = vmatpush2.msra.mxu0 0.0
  %220 = vmatprep.subr.mxu0 0.0
  %221 = vmatpush2.msra.mxu0 0.0
  %222 = vmatprep.subr.mxu0 0.0
  %223 = vmatpush2.msra.mxu0 0.0
  %224 = vmatprep.subr.mxu0 0.0
  %225 = vmatpush2.msra.mxu0 0.0
  %226 = vmatprep.mubr.f32.mxu0 0.0
  %227 = vmatmul.mubr.f32.gmra.mxu0 %v160
  %v228 = vpop.f32.mrf.mxu0
  %v229 = vadd.f32 %v156, %v228
  %v230 = vpop.f32.mrf.mxu0
  %231 = vdwg.mxu0
  %v233 = vcombine.high %v229, %v229
  %v235 = vld [vmem:[%s7] sm:$0x1]
  %v236 = vld [vmem:[%s8] sm:$0x1]
  %v238 = vlaneseq
  %v239 = vshrl.u32 %v238, 7
  %v240 = vsub.s32 0, %v239
  %v241 = vrot.slane %v236, %v240
  %v243 = vrot.slane %v53, 4
  %v244 = vrot.slane %v54, 3
  %vm245 = vcmask 1041409
  %v246 = vsel %vm245, %v244, %v243
  %vm247 = vcmask 7168
  %v248 = vsel %vm247, %v246, 0
  %vm250 = vcmask 1040384
  %v252 = vsel %vm250, %v235, 0
  %254 = vmatprep.subr.mxu0 0.0
  %255 = vmatpush1.msra.mxu0 0.0
  %256 = vmatprep.subr.mxu0 0.0
  %257 = vmatpush1.msra.mxu0 0.0
  %258 = vmatprep.subr.mxu0 0.0
  %259 = vmatpush1.msra.mxu0 0.0
  %260 = vmatprep.subr.mxu0 0.0
  %261 = vmatpush1.msra.mxu0 0.0
  %262 = vmatprep.subr.mxu0 0.0
  %263 = vmatpush1.msra.mxu0 0.0
  %264 = vmatprep.subr.mxu0 0.0
  %265 = vmatpush1.msra.mxu0 0.0
  %266 = vmatprep.subr.mxu0 0.0
  %267 = vmatpush1.msra.mxu0 0.0
  %268 = vmatprep.subr.mxu0 0.0
  %269 = vmatpush1.msra.mxu0 0.0
  %270 = vmatprep.subr.mxu0 0.0
  %271 = vmatpush1.msra.mxu0 0.0
  %272 = vmatprep.subr.mxu0 0.0
  %273 = vmatpush1.msra.mxu0 0.0
  %274 = vmatprep.subr.mxu0 0.0
  %275 = vmatpush1.msra.mxu0 0.0
  %276 = vmatprep.subr.mxu0 0.0
  %277 = vmatpush1.msra.mxu0 0.0
  %278 = vmatprep.subr.mxu0 0.0
  %279 = vmatpush1.msra.mxu0 0.0
  %280 = vmatprep.subr.mxu0 0.0
  %281 = vmatpush1.msra.mxu0 0.0
  %282 = vmatprep.subr.mxu0 0.0
  %283 = vmatpush1.msra.mxu0 0.0
  %284 = vmatprep.subr.mxu0 0.0
  %285 = vmatpush1.msra.mxu0 %v252
  %286 = vmatprep.subr.mxu0 0.0
  %287 = vmatpush2.msra.mxu0 0.0
  %288 = vmatprep.subr.mxu0 0.0
  %289 = vmatpush2.msra.mxu0 0.0
  %290 = vmatprep.subr.mxu0 0.0
  %291 = vmatpush2.msra.mxu0 0.0
  %292 = vmatprep.subr.mxu0 0.0
  %293 = vmatpush2.msra.mxu0 0.0
  %294 = vmatprep.subr.mxu0 0.0
  %295 = vmatpush2.msra.mxu0 0.0
  %296 = vmatprep.subr.mxu0 0.0
  %297 = vmatpush2.msra.mxu0 0.0
  %298 = vmatprep.subr.mxu0 0.0
  %299 = vmatpush2.msra.mxu0 0.0
  %300 = vmatprep.subr.mxu0 0.0
  %301 = vmatpush2.msra.mxu0 0.0
  %302 = vmatprep.subr.mxu0 0.0
  %303 = vmatpush2.msra.mxu0 0.0
  %304 = vmatprep.subr.mxu0 0.0
  %305 = vmatpush2.msra.mxu0 0.0
  %306 = vmatprep.subr.mxu0 0.0
  %307 = vmatpush2.msra.mxu0 0.0
  %308 = vmatprep.subr.mxu0 0.0
  %309 = vmatpush2.msra.mxu0 0.0
  %310 = vmatprep.subr.mxu0 0.0
  %311 = vmatpush2.msra.mxu0 0.0
  %312 = vmatprep.subr.mxu0 0.0
  %313 = vmatpush2.msra.mxu0 0.0
  %314 = vmatprep.subr.mxu0 0.0
  %315 = vmatpush2.msra.mxu0 0.0
  %316 = vmatprep.subr.mxu0 0.0
  %317 = vmatpush2.msra.mxu0 0.0
  %318 = vmatprep.mubr.f32.mxu0 0.0
  %319 = vmatmul.mubr.f32.gmra.mxu0 %v248
  %v320 = vpop.f32.mrf.mxu0
  %v321 = vadd.f32 %v241, %v320
  %v322 = vpop.f32.mrf.mxu0
  %323 = vdwg.mxu0
  %vm324 = vcmp.gt.f32.partialorder %v321, 0.0
  %v325 = vmul.f32 %v321, 0.01
  %v326 = vsel %vm324, %v321, %v325
  %v327 = vld [vmem:[%s9] sm:$0xff]
  %v328 = vld [vmem:[%s9 + $0x8] sm:$0xff]
  %v329 = vld [vmem:[%s9 + $0x10] sm:$0xff]
  %v330 = vld [vmem:[%s9 + $0x18] sm:$0xff]
  %v331 = vld [vmem:[%s10] sm:$0x1]
  %v333 = vlaneseq
  %v334 = vshrl.u32 %v333, 7
  %v335 = vsub.s32 0, %v334
  %v336 = vrot.slane %v331, %v335
  %v339 = vsel %vm158, %v326, 0
  %341 = vmatprep.subr.mxu0 0.0
  %342 = vmatpush1.msra.mxu0 0.0
  %343 = vmatprep.subr.mxu0 0.0
  %344 = vmatpush1.msra.mxu0 0.0
  %345 = vmatprep.subr.mxu0 0.0
  %346 = vmatpush1.msra.mxu0 0.0
  %347 = vmatprep.subr.mxu0 0.0
  %348 = vmatpush1.msra.mxu0 0.0
  %349 = vmatprep.subr.mxu0 0.0
  %350 = vmatpush1.msra.mxu0 0.0
  %351 = vmatprep.subr.mxu0 0.0
  %352 = vmatpush1.msra.mxu0 0.0
  %353 = vmatprep.subr.mxu0 0.0
  %354 = vmatpush1.msra.mxu0 0.0
  %355 = vmatprep.subr.mxu0 0.0
  %356 = vmatpush1.msra.mxu0 0.0
  %357 = vmatprep.subr.mxu0 0.0
  %358 = vmatpush1.msra.mxu0 0.0
  %359 = vmatprep.subr.mxu0 0.0
  %360 = vmatpush1.msra.mxu0 0.0
  %361 = vmatprep.subr.mxu0 0.0
  %362 = vmatpush1.msra.mxu0 0.0
  %363 = vmatprep.subr.mxu0 0.0
  %364 = vmatpush1.msra.mxu0 0.0
  %365 = vmatprep.subr.mxu0 0.0
  %366 = vmatpush1.msra.mxu0 %v330
  %367 = vmatprep.subr.mxu0 0.0
  %368 = vmatpush1.msra.mxu0 %v329
  %369 = vmatprep.subr.mxu0 0.0
  %370 = vmatpush1.msra.mxu0 %v328
  %371 = vmatprep.subr.mxu0 0.0
  %372 = vmatpush1.msra.mxu0 %v327
  %373 = vmatprep.subr.mxu0 0.0
  %374 = vmatpush2.msra.mxu0 0.0
  %375 = vmatprep.subr.mxu0 0.0
  %376 = vmatpush2.msra.mxu0 0.0
  %377 = vmatprep.subr.mxu0 0.0
  %378 = vmatpush2.msra.mxu0 0.0
  %379 = vmatprep.subr.mxu0 0.0
  %380 = vmatpush2.msra.mxu0 0.0
  %381 = vmatprep.subr.mxu0 0.0
  %382 = vmatpush2.msra.mxu0 0.0
  %383 = vmatprep.subr.mxu0 0.0
  %384 = vmatpush2.msra.mxu0 0.0
  %385 = vmatprep.subr.mxu0 0.0
  %386 = vmatpush2.msra.mxu0 0.0
  %387 = vmatprep.subr.mxu0 0.0
  %388 = vmatpush2.msra.mxu0 0.0
  %389 = vmatprep.subr.mxu0 0.0
  %390 = vmatpush2.msra.mxu0 0.0
  %391 = vmatprep.subr.mxu0 0.0
  %392 = vmatpush2.msra.mxu0 0.0
  %393 = vmatprep.subr.mxu0 0.0
  %394 = vmatpush2.msra.mxu0 0.0
  %395 = vmatprep.subr.mxu0 0.0
  %396 = vmatpush2.msra.mxu0 0.0
  %397 = vmatprep.subr.mxu0 0.0
  %398 = vmatpush2.msra.mxu0 0.0
  %399 = vmatprep.subr.mxu0 0.0
  %400 = vmatpush2.msra.mxu0 0.0
  %401 = vmatprep.subr.mxu0 0.0
  %402 = vmatpush2.msra.mxu0 0.0
  %403 = vmatprep.subr.mxu0 0.0
  %404 = vmatpush2.msra.mxu0 0.0
  %405 = vmatprep.mubr.f32.mxu0 0.0
  %406 = vmatmul.mubr.f32.gmra.mxu0 %v339
  %v407 = vpop.f32.mrf.mxu0
  %v408 = vadd.f32 %v336, %v407
  %v409 = vpop.f32.mrf.mxu0
  %410 = vdwg.mxu0
  %v413 = vunpack.c.l.s4 1966171168
  %v414 = vunpack.c.0.s8 %v413
  %v415 = vlaneseq
  %v416 = vshrl.u32 %v415, 7
  %v417 = vsub.s32 %v414, %v416
  %v418 = vrot.slane %v408, %v417
  %v419 = vcombine.high %v418, %v418
  %v421 = vunpack.c.l.s4 1966171168
  %v422 = vunpack.c.0.s8 %v421
  %v423 = vlaneseq
  %v424 = vshrl.u32 %v423, 7
  %v425 = vsub.s32 %v422, %v424
  %v426 = vrot.slane %v418, %v425
  %v428 = vunpack.c.l.s4 1966171168
  %v429 = vunpack.c.0.s8 %v428
  %v430 = vlaneseq
  %v431 = vshrl.u32 %v430, 7
  %v432 = vsub.s32 %v429, %v431
  %v433 = vrot.slane %v419, %v432
  %v436 = vcombine.high %v53, %v53
  %v438 = vunpack.c.l.s4 1966171168
  %v439 = vunpack.c.0.s8 %v438
  %v440 = vlaneseq
  %v441 = vshrl.u32 %v440, 7
  %v442 = vsub.s32 %v439, %v441
  %v443 = vrot.slane %v436, %v442
  %v444 = vcombine.high %v443, %v443
  %v446 = vunpack.c.l.s4 1966171168
  %v447 = vunpack.c.0.s8 %v446
  %v448 = vlaneseq
  %v449 = vshrl.u32 %v448, 7
  %v450 = vsub.s32 %v447, %v449
  %v451 = vrot.slane %v443, %v450
  %v453 = vunpack.c.l.s4 1966171168
  %v454 = vunpack.c.0.s8 %v453
  %v455 = vlaneseq
  %v456 = vshrl.u32 %v455, 7
  %v457 = vsub.s32 %v454, %v456
  %v458 = vrot.slane %v444, %v457
  %v459 = vcombine.high %v451, %v451
  %v460 = vcombine.high %v458, %v458
  %v461 = vcombine.high %v54, %v54
  %v463 = vunpack.c.l.s4 1966171168
  %v464 = vunpack.c.0.s8 %v463
  %v465 = vlaneseq
  %v466 = vshrl.u32 %v465, 7
  %v467 = vsub.s32 %v464, %v466
  %v468 = vrot.slane %v461, %v467
  %v469 = vcombine.high %v468, %v468
  %v471 = vunpack.c.l.s4 1966171168
  %v472 = vunpack.c.0.s8 %v471
  %v473 = vlaneseq
  %v474 = vshrl.u32 %v473, 7
  %v475 = vsub.s32 %v472, %v474
  %v476 = vrot.slane %v468, %v475
  %v478 = vunpack.c.l.s4 1966171168
  %v479 = vunpack.c.0.s8 %v478
  %v480 = vlaneseq
  %v481 = vshrl.u32 %v480, 7
  %v482 = vsub.s32 %v479, %v481
  %v483 = vrot.slane %v469, %v482
  %v484 = vcombine.high %v476, %v476
  %v485 = vcombine.high %v483, %v483
  %v486 = vld [vmem:[%s11] sm:$0x1f]
  %v487 = vld [vmem:[%s12] sm:$0x1]
  %v489 = vlaneseq
  %v490 = vshrl.u32 %v489, 7
  %v491 = vsub.s32 0, %v490
  %v492 = vrot.slane %v487, %v491
  %v494 = vcombine.low %v458, %v459
  %v495 = vcombine.low %v460, %v483
  %v496 = vcombine.low %v484, %v485
  %v498 = vunpack.c.l.s4 1966171168
  %v499 = vunpack.c.0.s8 %v498
  %v500 = vlaneseq
  %v501 = vshrl.u32 %v500, 7
  %v502 = vsub.s32 %v499, %v501
  %v503 = vrot.slane %v494, %v502
  %v505 = vunpack.c.l.s4 1966171168
  %v506 = vunpack.c.0.s8 %v505
  %v507 = vlaneseq
  %v508 = vshrl.u32 %v507, 7
  %v509 = vsub.s32 %v506, %v508
  %v510 = vrot.slane %v495, %v509
  %v512 = vunpack.c.l.s4 1966171168
  %v513 = vunpack.c.0.s8 %v512
  %v514 = vlaneseq
  %v515 = vshrl.u32 %v514, 7
  %v516 = vsub.s32 %v513, %v515
  %v517 = vrot.slane %v496, %v516
  %v518 = vcombine.low %v503, %v510
  %v520 = vunpack.c.l.s4 1966171168
  %v521 = vunpack.c.0.s8 %v520
  %v522 = vlaneseq
  %v523 = vshrl.u32 %v522, 7
  %v524 = vsub.s32 %v521, %v523
  %v525 = vrot.slane %v518, %v524
  %v527 = vunpack.c.l.s4 1966171168
  %v528 = vunpack.c.0.s8 %v527
  %v529 = vlaneseq
  %v530 = vshrl.u32 %v529, 7
  %v531 = vsub.s32 %v528, %v530
  %v532 = vrot.slane %v517, %v531
  %v533 = vcombine.low %v525, %v532
  %vm534 = vcmask 39936
  %v535 = vsel %vm534, %v533, 0
  %vm537 = vcmask 1044480
  %v539 = vsel %vm537, %v486, 0
  %541 = vmatprep.subr.mxu0 0.0
  %542 = vmatpush1.msra.mxu0 0.0
  %543 = vmatprep.subr.mxu0 0.0
  %544 = vmatpush1.msra.mxu0 0.0
  %545 = vmatprep.subr.mxu0 0.0
  %546 = vmatpush1.msra.mxu0 0.0
  %547 = vmatprep.subr.mxu0 0.0
  %548 = vmatpush1.msra.mxu0 0.0
  %549 = vmatprep.subr.mxu0 0.0
  %550 = vmatpush1.msra.mxu0 0.0
  %551 = vmatprep.subr.mxu0 0.0
  %552 = vmatpush1.msra.mxu0 0.0
  %553 = vmatprep.subr.mxu0 0.0
  %554 = vmatpush1.msra.mxu0 0.0
  %555 = vmatprep.subr.mxu0 0.0
  %556 = vmatpush1.msra.mxu0 0.0
  %557 = vmatprep.subr.mxu0 0.0
  %558 = vmatpush1.msra.mxu0 0.0
  %559 = vmatprep.subr.mxu0 0.0
  %560 = vmatpush1.msra.mxu0 0.0
  %561 = vmatprep.subr.mxu0 0.0
  %562 = vmatpush1.msra.mxu0 0.0
  %563 = vmatprep.subr.mxu0 0.0
  %564 = vmatpush1.msra.mxu0 0.0
  %565 = vmatprep.subr.mxu0 0.0
  %566 = vmatpush1.msra.mxu0 0.0
  %567 = vmatprep.subr.mxu0 0.0
  %568 = vmatpush1.msra.mxu0 0.0
  %569 = vmatprep.subr.mxu0 0.0
  %570 = vmatpush1.msra.mxu0 0.0
  %571 = vmatprep.subr.mxu0 0.0
  %572 = vmatpush1.msra.mxu0 %v539
  %573 = vmatprep.subr.mxu0 0.0
  %574 = vmatpush2.msra.mxu0 0.0
  %575 = vmatprep.subr.mxu0 0.0
  %576 = vmatpush2.msra.mxu0 0.0
  %577 = vmatprep.subr.mxu0 0.0
  %578 = vmatpush2.msra.mxu0 0.0
  %579 = vmatprep.subr.mxu0 0.0
  %580 = vmatpush2.msra.mxu0 0.0
  %581 = vmatprep.subr.mxu0 0.0
  %582 = vmatpush2.msra.mxu0 0.0
  %583 = vmatprep.subr.mxu0 0.0
  %584 = vmatpush2.msra.mxu0 0.0
  %585 = vmatprep.subr.mxu0 0.0
  %586 = vmatpush2.msra.mxu0 0.0
  %587 = vmatprep.subr.mxu0 0.0
  %588 = vmatpush2.msra.mxu0 0.0
  %589 = vmatprep.subr.mxu0 0.0
  %590 = vmatpush2.msra.mxu0 0.0
  %591 = vmatprep.subr.mxu0 0.0
  %592 = vmatpush2.msra.mxu0 0.0
  %593 = vmatprep.subr.mxu0 0.0
  %594 = vmatpush2.msra.mxu0 0.0
  %595 = vmatprep.subr.mxu0 0.0
  %596 = vmatpush2.msra.mxu0 0.0
  %597 = vmatprep.subr.mxu0 0.0
  %598 = vmatpush2.msra.mxu0 0.0
  %599 = vmatprep.subr.mxu0 0.0
  %600 = vmatpush2.msra.mxu0 0.0
  %601 = vmatprep.subr.mxu0 0.0
  %602 = vmatpush2.msra.mxu0 0.0
  %603 = vmatprep.subr.mxu0 0.0
  %604 = vmatpush2.msra.mxu0 0.0
  %605 = vmatprep.mubr.f32.mxu0 0.0
  %606 = vmatmul.mubr.f32.gmra.mxu0 %v535
  %v607 = vpop.f32.mrf.mxu0
  %v608 = vadd.f32 %v492, %v607
  %v609 = vpop.f32.mrf.mxu0
  %610 = vdwg.mxu0
  %vm611 = vcmp.gt.f32.partialorder %v608, 0.0
  %v612 = vmul.f32 %v608, 0.01
  %v613 = vsel %vm611, %v608, %v612
  %v614 = vld [vmem:[%s13] sm:$0xff]
  %v615 = vld [vmem:[%s13 + $0x8] sm:$0xff]
  %v616 = vld [vmem:[%s13 + $0x10] sm:$0xff]
  %v617 = vld [vmem:[%s13 + $0x18] sm:$0xff]
  %v618 = vld [vmem:[%s14] sm:$0x1]
  %v620 = vlaneseq
  %v621 = vshrl.u32 %v620, 7
  %v622 = vsub.s32 0, %v621
  %v623 = vrot.slane %v618, %v622
  %v626 = vsel %vm158, %v613, 0
  %628 = vmatprep.subr.mxu0 0.0
  %629 = vmatpush1.msra.mxu0 0.0
  %630 = vmatprep.subr.mxu0 0.0
  %631 = vmatpush1.msra.mxu0 0.0
  %632 = vmatprep.subr.mxu0 0.0
  %633 = vmatpush1.msra.mxu0 0.0
  %634 = vmatprep.subr.mxu0 0.0
  %635 = vmatpush1.msra.mxu0 0.0
  %636 = vmatprep.subr.mxu0 0.0
  %637 = vmatpush1.msra.mxu0 0.0
  %638 = vmatprep.subr.mxu0 0.0
  %639 = vmatpush1.msra.mxu0 0.0
  %640 = vmatprep.subr.mxu0 0.0
  %641 = vmatpush1.msra.mxu0 0.0
  %642 = vmatprep.subr.mxu0 0.0
  %643 = vmatpush1.msra.mxu0 0.0
  %644 = vmatprep.subr.mxu0 0.0
  %645 = vmatpush1.msra.mxu0 0.0
  %646 = vmatprep.subr.mxu0 0.0
  %647 = vmatpush1.msra.mxu0 0.0
  %648 = vmatprep.subr.mxu0 0.0
  %649 = vmatpush1.msra.mxu0 0.0
  %650 = vmatprep.subr.mxu0 0.0
  %651 = vmatpush1.msra.mxu0 0.0
  %652 = vmatprep.subr.mxu0 0.0
  %653 = vmatpush1.msra.mxu0 %v617
  %654 = vmatprep.subr.mxu0 0.0
  %655 = vmatpush1.msra.mxu0 %v616
  %656 = vmatprep.subr.mxu0 0.0
  %657 = vmatpush1.msra.mxu0 %v615
  %658 = vmatprep.subr.mxu0 0.0
  %659 = vmatpush1.msra.mxu0 %v614
  %660 = vmatprep.subr.mxu0 0.0
  %661 = vmatpush2.msra.mxu0 0.0
  %662 = vmatprep.subr.mxu0 0.0
  %663 = vmatpush2.msra.mxu0 0.0
  %664 = vmatprep.subr.mxu0 0.0
  %665 = vmatpush2.msra.mxu0 0.0
  %666 = vmatprep.subr.mxu0 0.0
  %667 = vmatpush2.msra.mxu0 0.0
  %668 = vmatprep.subr.mxu0 0.0
  %669 = vmatpush2.msra.mxu0 0.0
  %670 = vmatprep.subr.mxu0 0.0
  %671 = vmatpush2.msra.mxu0 0.0
  %672 = vmatprep.subr.mxu0 0.0
  %673 = vmatpush2.msra.mxu0 0.0
  %674 = vmatprep.subr.mxu0 0.0
  %675 = vmatpush2.msra.mxu0 0.0
  %676 = vmatprep.subr.mxu0 0.0
  %677 = vmatpush2.msra.mxu0 0.0
  %678 = vmatprep.subr.mxu0 0.0
  %679 = vmatpush2.msra.mxu0 0.0
  %680 = vmatprep.subr.mxu0 0.0
  %681 = vmatpush2.msra.mxu0 0.0
  %682 = vmatprep.subr.mxu0 0.0
  %683 = vmatpush2.msra.mxu0 0.0
  %684 = vmatprep.subr.mxu0 0.0
  %685 = vmatpush2.msra.mxu0 0.0
  %686 = vmatprep.subr.mxu0 0.0
  %687 = vmatpush2.msra.mxu0 0.0
  %688 = vmatprep.subr.mxu0 0.0
  %689 = vmatpush2.msra.mxu0 0.0
  %690 = vmatprep.subr.mxu0 0.0
  %691 = vmatpush2.msra.mxu0 0.0
  %692 = vmatprep.mubr.f32.mxu0 0.0
  %693 = vmatmul.mubr.f32.gmra.mxu0 %v626
  %v694 = vpop.f32.mrf.mxu0
  %v695 = vadd.f32 %v623, %v694
  %v696 = vpop.f32.mrf.mxu0
  %697 = vdwg.mxu0
  %v699 = vcombine.high %v695, %v695
  %v701 = vunpack.c.l.s4 1966171168
  %v702 = vunpack.c.0.s8 %v701
  %v703 = vlaneseq
  %v704 = vshrl.u32 %v703, 7
  %v705 = vsub.s32 %v702, %v704
  %v706 = vrot.slane %v695, %v705
  %v708 = vunpack.c.l.s4 1966171168
  %v709 = vunpack.c.0.s8 %v708
  %v710 = vlaneseq
  %v711 = vshrl.u32 %v710, 7
  %v712 = vsub.s32 %v709, %v711
  %v713 = vrot.slane %v699, %v712
  %v714 = vcombine.high %v706, %v706
  %v715 = vcombine.high %v713, %v713
  %v717 = vunpack.c.l.s4 1966171168
  %v718 = vunpack.c.0.s8 %v717
  %v719 = vlaneseq
  %v720 = vshrl.u32 %v719, 7
  %v721 = vsub.s32 %v718, %v720
  %v722 = vrot.slane %v706, %v721
  %v724 = vunpack.c.l.s4 1966171168
  %v725 = vunpack.c.0.s8 %v724
  %v726 = vlaneseq
  %v727 = vshrl.u32 %v726, 7
  %v728 = vsub.s32 %v725, %v727
  %v729 = vrot.slane %v713, %v728
  %v731 = vunpack.c.l.s4 1966171168
  %v732 = vunpack.c.0.s8 %v731
  %v733 = vlaneseq
  %v734 = vshrl.u32 %v733, 7
  %v735 = vsub.s32 %v732, %v734
  %v736 = vrot.slane %v714, %v735
  %v738 = vunpack.c.l.s4 1966171168
  %v739 = vunpack.c.0.s8 %v738
  %v740 = vlaneseq
  %v741 = vshrl.u32 %v740, 7
  %v742 = vsub.s32 %v739, %v741
  %v743 = vrot.slane %v715, %v742
  %v744 = vcombine.high %v722, %v722
  %v745 = vcombine.high %v736, %v736
  %v752 = vlaneseq
  %v753 = vshrl.u32 %v752, 7
  %v754 = vsub.s32 0, %v753
  %v755 = vrot.slane %v55, %v754
  %757 = vbcast.lane.b32.xlu0 %v755, 256
  %v758 = vpop.permute.xlu0 %757
  %v759 = vlaneseq
  %v760 = vshrl.u32 %v759, 7
  %v761 = vsub.s32 1, %v760
  %v762 = vrot.slane %v55, %v761
  %764 = vbcast.lane.b32.xlu0 %v762, 256
  %v765 = vpop.permute.xlu0 %764
  %v766 = vmul.f32 %v229, %v758
  %v767 = vmul.f32 %v233, %v765
  %v770 = vunpack.c.l.s4 1966171168
  %v771 = vunpack.c.0.s8 %v770
  %v772 = vlaneseq
  %v773 = vshrl.u32 %v772, 7
  %v774 = vsub.s32 %v771, %v773
  %v775 = vrot.slane %v55, %v774
  %v776 = vcombine.high %v775, %v775
  %v778 = vunpack.c.l.s4 1966171168
  %v779 = vunpack.c.0.s8 %v778
  %v780 = vlaneseq
  %v781 = vshrl.u32 %v780, 7
  %v782 = vsub.s32 %v779, %v781
  %v783 = vrot.slane %v775, %v782
  %v785 = vunpack.c.l.s4 1966171168
  %v786 = vunpack.c.0.s8 %v785
  %v787 = vlaneseq
  %v788 = vshrl.u32 %v787, 7
  %v789 = vsub.s32 %v786, %v788
  %v790 = vrot.slane %v776, %v789
  %791 = vset.pattern.permute.xlu0 4
  %792 = vperm.xlu0 %791, %v783
  %v793 = vpop.permute.xlu0 %792
  %v795 = vlaneseq
  %v796 = vshrl.u32 %v795, 7
  %v797 = vsub.s32 0, %v796
  %v798 = vrot.slane %v793, %v797
  %799 = vset.pattern.permute.xlu0 4
  %800 = vperm.xlu0 %799, %v790
  %v801 = vpop.permute.xlu0 %800
  %v803 = vlaneseq
  %v804 = vshrl.u32 %v803, 7
  %v805 = vsub.s32 0, %v804
  %v806 = vrot.slane %v801, %v805
  %v807 = vmul.f32 %v426, %v798
  %v808 = vmul.f32 %v433, %v806
  %s810 = sor.u32 256, 5
  %811 = vbcast.lane.b32.xlu0 %v755, %s810
  %v812 = vpop.permute.xlu0 %811
  %s814 = sor.u32 256, 5
  %815 = vbcast.lane.b32.xlu0 %v762, %s814
  %v816 = vpop.permute.xlu0 %815
  %v819 = vlaneseq
  %v820 = vshrl.u32 %v819, 7
  %v821 = vsub.s32 0, %v820
  %v822 = vrot.slane %v812, %v821
  %v823 = vlaneseq
  %v824 = vshrl.u32 %v823, 7
  %v825 = vsub.s32 1, %v824
  %v826 = vrot.slane %v812, %v825
  %v827 = vlaneseq
  %v828 = vshrl.u32 %v827, 7
  %v829 = vsub.s32 2, %v828
  %v830 = vrot.slane %v812, %v829
  %v831 = vlaneseq
  %v832 = vshrl.u32 %v831, 7
  %v833 = vsub.s32 0, %v832
  %v834 = vrot.slane %v816, %v833
  %v835 = vlaneseq
  %v836 = vshrl.u32 %v835, 7
  %v837 = vsub.s32 1, %v836
  %v838 = vrot.slane %v816, %v837
  %v839 = vlaneseq
  %v840 = vshrl.u32 %v839, 7
  %v841 = vsub.s32 2, %v840
  %v842 = vrot.slane %v816, %v841
  %v849 = vmul.f32 %v722, %v822
  %v850 = vmul.f32 %v736, %v826
  %v851 = vmul.f32 %v744, %v830
  %v852 = vmul.f32 %v745, %v834
  %v853 = vmul.f32 %v729, %v838
  %v854 = vmul.f32 %v743, %v842
  %vm855 = vcmask 58368
  %v856 = vsel %vm855, %v55, 0.0
  %857 = vadd.xlane.f32.xlu0 %v856
  %v858 = vpop.xlane.xlu0 %857
  %v859 = vmax.f32 %v858, 1.0
  %vm860 = vcmask 257024
  %v861 = vsel %vm860, %v766, 0.0
  %v862 = vrot.slane %v861, 4
  %v863 = vadd.f32 %v861, %v862
  %v864 = vrot.slane %v863, 2
  %v865 = vadd.f32 %v863, %v864
  %v866 = vrot.slane %v865, 1
  %v867 = vadd.f32 %v865, %v866
  %v868 = vsel %vm860, %v767, 0.0
  %v869 = vrot.slane %v868, 4
  %v870 = vadd.f32 %v868, %v869
  %v871 = vrot.slane %v870, 2
  %v872 = vadd.f32 %v870, %v871
  %v873 = vrot.slane %v872, 1
  %v874 = vadd.f32 %v872, %v873
  %v875 = vadd.f32 %v807, 0.0
  %v876 = vadd.f32 %v808, 0.0
  %v877 = vadd.f32 %v867, %v875
  %v878 = vadd.f32 %v874, %v876
  %v885 = vcombine.low %v849, %v850
  %v887 = vunpack.c.l.s4 1966171168
  %v888 = vunpack.c.0.s8 %v887
  %v889 = vlaneseq
  %v890 = vshrl.u32 %v889, 7
  %v891 = vsub.s32 %v888, %v890
  %v892 = vrot.slane %v885, %v891
  %v894 = vunpack.c.l.s4 1966171168
  %v895 = vunpack.c.0.s8 %v894
  %v896 = vlaneseq
  %v897 = vshrl.u32 %v896, 7
  %v898 = vsub.s32 %v895, %v897
  %v899 = vrot.slane %v851, %v898
  %v900 = vcombine.low %v892, %v899
  %v902 = vunpack.c.l.s4 1966171168
  %v903 = vunpack.c.0.s8 %v902
  %v904 = vlaneseq
  %v905 = vshrl.u32 %v904, 7
  %v906 = vsub.s32 %v903, %v905
  %v907 = vrot.slane %v900, %v906
  %v908 = vcombine.low %v852, %v853
  %v910 = vunpack.c.l.s4 1966171168
  %v911 = vunpack.c.0.s8 %v910
  %v912 = vlaneseq
  %v913 = vshrl.u32 %v912, 7
  %v914 = vsub.s32 %v911, %v913
  %v915 = vrot.slane %v908, %v914
  %v917 = vunpack.c.l.s4 1966171168
  %v918 = vunpack.c.0.s8 %v917
  %v919 = vlaneseq
  %v920 = vshrl.u32 %v919, 7
  %v921 = vsub.s32 %v918, %v920
  %v922 = vrot.slane %v854, %v921
  %v923 = vcombine.low %v915, %v922
  %v925 = vunpack.c.l.s4 1966171168
  %v926 = vunpack.c.0.s8 %v925
  %v927 = vlaneseq
  %v928 = vshrl.u32 %v927, 7
  %v929 = vsub.s32 %v926, %v928
  %v930 = vrot.slane %v923, %v929
  %vm933 = vcmask 256000
  %v934 = vsel %vm933, %v907, 0.0
  %v935 = vrot.slane %v934, 4
  %v936 = vadd.f32 %v934, %v935
  %v937 = vrot.slane %v936, 2
  %v938 = vadd.f32 %v936, %v937
  %v939 = vrot.slane %v938, 1
  %v940 = vadd.f32 %v938, %v939
  %v941 = vsel %vm933, %v930, 0.0
  %v942 = vrot.slane %v941, 4
  %v943 = vadd.f32 %v941, %v942
  %v944 = vrot.slane %v943, 2
  %v945 = vadd.f32 %v943, %v944
  %v946 = vrot.slane %v945, 1
  %v947 = vadd.f32 %v945, %v946
  %v948 = vadd.f32 %v877, %v940
  %v949 = vadd.f32 %v878, %v947
  %v951 = vrot.slane %v859, 1
  %v954 = vrcp.pop %v859
  %v955 = vmul.f32 %v948, %v954
  %v956 = vrcp.pop %v951
  %v957 = vmul.f32 %v949, %v956
  %v958 = vld [vmem:[%s15] sm:$0xff]
  %v959 = vld [vmem:[%s15 + $0x8] sm:$0xff]
  %v960 = vld [vmem:[%s15 + $0x10] sm:$0xff]
  %v961 = vld [vmem:[%s15 + $0x18] sm:$0xff]
  %v964 = vrot.slane %v957, 7
  %v965 = vsel %vm245, %v964, %v955
  %v966 = vsel %vm158, %v965, 0
  %968 = vmatprep.subr.mxu0 0.0
  %969 = vmatpush1.msra.mxu0 0.0
  %970 = vmatprep.subr.mxu0 0.0
  %971 = vmatpush1.msra.mxu0 0.0
  %972 = vmatprep.subr.mxu0 0.0
  %973 = vmatpush1.msra.mxu0 0.0
  %974 = vmatprep.subr.mxu0 0.0
  %975 = vmatpush1.msra.mxu0 0.0
  %976 = vmatprep.subr.mxu0 0.0
  %977 = vmatpush1.msra.mxu0 0.0
  %978 = vmatprep.subr.mxu0 0.0
  %979 = vmatpush1.msra.mxu0 0.0
  %980 = vmatprep.subr.mxu0 0.0
  %981 = vmatpush1.msra.mxu0 0.0
  %982 = vmatprep.subr.mxu0 0.0
  %983 = vmatpush1.msra.mxu0 0.0
  %984 = vmatprep.subr.mxu0 0.0
  %985 = vmatpush1.msra.mxu0 0.0
  %986 = vmatprep.subr.mxu0 0.0
  %987 = vmatpush1.msra.mxu0 0.0
  %988 = vmatprep.subr.mxu0 0.0
  %989 = vmatpush1.msra.mxu0 0.0
  %990 = vmatprep.subr.mxu0 0.0
  %991 = vmatpush1.msra.mxu0 0.0
  %992 = vmatprep.subr.mxu0 0.0
  %993 = vmatpush1.msra.mxu0 %v961
  %994 = vmatprep.subr.mxu0 0.0
  %995 = vmatpush1.msra.mxu0 %v960
  %996 = vmatprep.subr.mxu0 0.0
  %997 = vmatpush1.msra.mxu0 %v959
  %998 = vmatprep.subr.mxu0 0.0
  %999 = vmatpush1.msra.mxu0 %v958
  %1000 = vmatprep.subr.mxu0 0.0
  %1001 = vmatpush2.msra.mxu0 0.0
  %1002 = vmatprep.subr.mxu0 0.0
  %1003 = vmatpush2.msra.mxu0 0.0
  %1004 = vmatprep.subr.mxu0 0.0
  %1005 = vmatpush2.msra.mxu0 0.0
  %1006 = vmatprep.subr.mxu0 0.0
  %1007 = vmatpush2.msra.mxu0 0.0
  %1008 = vmatprep.subr.mxu0 0.0
  %1009 = vmatpush2.msra.mxu0 0.0
  %1010 = vmatprep.subr.mxu0 0.0
  %1011 = vmatpush2.msra.mxu0 0.0
  %1012 = vmatprep.subr.mxu0 0.0
  %1013 = vmatpush2.msra.mxu0 0.0
  %1014 = vmatprep.subr.mxu0 0.0
  %1015 = vmatpush2.msra.mxu0 0.0
  %1016 = vmatprep.subr.mxu0 0.0
  %1017 = vmatpush2.msra.mxu0 0.0
  %1018 = vmatprep.subr.mxu0 0.0
  %1019 = vmatpush2.msra.mxu0 0.0
  %1020 = vmatprep.subr.mxu0 0.0
  %1021 = vmatpush2.msra.mxu0 0.0
  %1022 = vmatprep.subr.mxu0 0.0
  %1023 = vmatpush2.msra.mxu0 0.0
  %1024 = vmatprep.subr.mxu0 0.0
  %1025 = vmatpush2.msra.mxu0 0.0
  %1026 = vmatprep.subr.mxu0 0.0
  %1027 = vmatpush2.msra.mxu0 0.0
  %1028 = vmatprep.subr.mxu0 0.0
  %1029 = vmatpush2.msra.mxu0 0.0
  %1030 = vmatprep.subr.mxu0 0.0
  %1031 = vmatpush2.msra.mxu0 0.0
  %1032 = vmatprep.mubr.f32.mxu0 0.0
  %1033 = vmatmul.mubr.f32.gmra.mxu0 %v966
  %v1034 = vpop.f32.mrf.mxu0
  %v1035 = vadd.f32 0.0, %v1034
  %v1036 = vpop.f32.mrf.mxu0
  %1037 = vdwg.mxu0
  %v1040 = vunpack.c.l.s4 1966171168
  %v1041 = vunpack.c.0.s8 %v1040
  %v1042 = vlaneseq
  %v1043 = vshrl.u32 %v1042, 7
  %v1044 = vsub.s32 %v1041, %v1043
  %v1045 = vrot.slane %v1035, %v1044
  %v1046 = vcombine.high %v1045, %v1045
  %v1048 = vunpack.c.l.s4 1966171168
  %v1049 = vunpack.c.0.s8 %v1048
  %v1050 = vlaneseq
  %v1051 = vshrl.u32 %v1050, 7
  %v1052 = vsub.s32 %v1049, %v1051
  %v1053 = vrot.slane %v1045, %v1052
  %v1055 = vunpack.c.l.s4 1966171168
  %v1056 = vunpack.c.0.s8 %v1055
  %v1057 = vlaneseq
  %v1058 = vshrl.u32 %v1057, 7
  %v1059 = vsub.s32 %v1056, %v1058
  %v1060 = vrot.slane %v1046, %v1059
  %v1061 = vlaneseq
  %v1062 = vshrl.u32 %v1061, 7
  %v1063 = vsub.s32 0, %v1062
  %v1064 = vrot.slane %v1053, %v1063
  %v1065 = vlaneseq
  %v1066 = vshrl.u32 %v1065, 7
  %v1067 = vsub.s32 0, %v1066
  %v1068 = vrot.slane %v1060, %v1067
  %v1070 = vunpack.c.l.s4 1966171168
  %v1071 = vunpack.c.0.s8 %v1070
  %v1072 = vlaneseq
  %v1073 = vshrl.u32 %v1072, 7
  %v1074 = vsub.s32 %v1071, %v1073
  %v1075 = vrot.slane %v1064, %v1074
  %v1076 = vcombine.high %v1075, %v1075
  %v1078 = vunpack.c.l.s4 1966171168
  %v1079 = vunpack.c.0.s8 %v1078
  %v1080 = vlaneseq
  %v1081 = vshrl.u32 %v1080, 7
  %v1082 = vsub.s32 %v1079, %v1081
  %v1083 = vrot.slane %v1075, %v1082
  %v1085 = vunpack.c.l.s4 1966171168
  %v1086 = vunpack.c.0.s8 %v1085
  %v1087 = vlaneseq
  %v1088 = vshrl.u32 %v1087, 7
  %v1089 = vsub.s32 %v1086, %v1088
  %v1090 = vrot.slane %v1076, %v1089
  %v1091 = vcombine.high %v1083, %v1083
  %v1093 = vunpack.c.l.s4 1966171168
  %v1094 = vunpack.c.0.s8 %v1093
  %v1095 = vlaneseq
  %v1096 = vshrl.u32 %v1095, 7
  %v1097 = vsub.s32 %v1094, %v1096
  %v1098 = vrot.slane %v1068, %v1097
  %v1099 = vcombine.high %v1098, %v1098
  %v1101 = vunpack.c.l.s4 1966171168
  %v1102 = vunpack.c.0.s8 %v1101
  %v1103 = vlaneseq
  %v1104 = vshrl.u32 %v1103, 7
  %v1105 = vsub.s32 %v1102, %v1104
  %v1106 = vrot.slane %v1098, %v1105
  %v1108 = vunpack.c.l.s4 1966171168
  %v1109 = vunpack.c.0.s8 %v1108
  %v1110 = vlaneseq
  %v1111 = vshrl.u32 %v1110, 7
  %v1112 = vsub.s32 %v1109, %v1111
  %v1113 = vrot.slane %v1099, %v1112
  %v1114 = vcombine.high %v1106, %v1106
  %1115 = vrot.lane.b32.xlu0 %v1083, 96
  %v1116 = vpop.permute.xlu0 %1115
  %1117 = vrot.lane.b32.xlu0 %v1090, 96
  %v1118 = vpop.permute.xlu0 %1117
  %1119 = vrot.lane.b32.xlu0 %v1091, 96
  %v1120 = vpop.permute.xlu0 %1119
  %1121 = vrot.lane.b32.xlu0 %v1106, 96
  %v1122 = vpop.permute.xlu0 %1121
  %1123 = vrot.lane.b32.xlu0 %v1113, 96
  %v1124 = vpop.permute.xlu0 %1123
  %1125 = vrot.lane.b32.xlu0 %v1114, 96
  %v1126 = vpop.permute.xlu0 %1125
  %v1133 = vmul.f32 %v849, %v1116
  %v1134 = vmul.f32 %v850, %v1118
  %v1135 = vmul.f32 %v851, %v1120
  %v1136 = vmul.f32 %v852, %v1122
  %v1137 = vmul.f32 %v853, %v1124
  %v1138 = vmul.f32 %v854, %v1126
  %v1145 = vcombine.low %v1133, %v1134
  %v1147 = vunpack.c.l.s4 1966171168
  %v1148 = vunpack.c.0.s8 %v1147
  %v1149 = vlaneseq
  %v1150 = vshrl.u32 %v1149, 7
  %v1151 = vsub.s32 %v1148, %v1150
  %v1152 = vrot.slane %v1145, %v1151
  %v1154 = vunpack.c.l.s4 1966171168
  %v1155 = vunpack.c.0.s8 %v1154
  %v1156 = vlaneseq
  %v1157 = vshrl.u32 %v1156, 7
  %v1158 = vsub.s32 %v1155, %v1157
  %v1159 = vrot.slane %v1135, %v1158
  %v1160 = vcombine.low %v1152, %v1159
  %v1162 = vunpack.c.l.s4 1966171168
  %v1163 = vunpack.c.0.s8 %v1162
  %v1164 = vlaneseq
  %v1165 = vshrl.u32 %v1164, 7
  %v1166 = vsub.s32 %v1163, %v1165
  %v1167 = vrot.slane %v1160, %v1166
  %v1168 = vcombine.low %v1136, %v1137
  %v1170 = vunpack.c.l.s4 1966171168
  %v1171 = vunpack.c.0.s8 %v1170
  %v1172 = vlaneseq
  %v1173 = vshrl.u32 %v1172, 7
  %v1174 = vsub.s32 %v1171, %v1173
  %v1175 = vrot.slane %v1168, %v1174
  %v1177 = vunpack.c.l.s4 1966171168
  %v1178 = vunpack.c.0.s8 %v1177
  %v1179 = vlaneseq
  %v1180 = vshrl.u32 %v1179, 7
  %v1181 = vsub.s32 %v1178, %v1180
  %v1182 = vrot.slane %v1138, %v1181
  %v1183 = vcombine.low %v1175, %v1182
  %v1185 = vunpack.c.l.s4 1966171168
  %v1186 = vunpack.c.0.s8 %v1185
  %v1187 = vlaneseq
  %v1188 = vshrl.u32 %v1187, 7
  %v1189 = vsub.s32 %v1186, %v1188
  %v1190 = vrot.slane %v1183, %v1189
  %v1193 = vsel %vm933, %v1167, 0.0
  %1194 = vadd.xlane.f32.xlu0 %v1193
  %v1195 = vpop.xlane.xlu0 %1194
  %v1196 = vsel %vm933, %v1190, 0.0
  %1197 = vadd.xlane.f32.xlu0 %v1196
  %v1198 = vpop.xlane.xlu0 %1197
  %v1199 = vmul.f32 %v1195, 0.17677669
  %v1200 = vmul.f32 %v1198, 0.17677669
  %v1201 = vtanh.pop %v1199
  %v1202 = vtanh.pop %v1200
  %v1203 = vmul.f32 %v1201, 10.0
  %v1204 = vmul.f32 %v1202, 10.0
  %v1207 = vlaneseq
  %v1208 = vand.u32 %v1207, 127
  %v1209 = vlaneseq
  %v1210 = vshrl.u32 %v1209, 7
  %v1211 = vsub.s32 %v1208, %v1210
  %v1212 = vrot.slane %v1203, %v1211
  %v1213 = vlaneseq
  %v1214 = vshrl.u32 %v1213, 7
  %v1215 = vsub.s32 %v1208, %v1214
  %v1216 = vrot.slane %v1204, %v1215
  %v1217 = vsel %vm245, %v1216, %v1212
  %vm1219 = vcmask 17408
  %v1220 = vsel %vm1219, %v1217, -inf
  %1221 = vmax.xlane.f32.xlu0 %v1220
  %v1222 = vpop.xlane.xlu0 %1221
  %v1224 = vlaneseq
  %v1225 = vshrl.u32 %v1224, 7
  %v1226 = vsub.s32 0, %v1225
  %v1227 = vrot.slane %v1222, %v1226
  %v1228 = vlaneseq
  %v1229 = vshrl.u32 %v1228, 7
  %v1230 = vsub.s32 1, %v1229
  %v1231 = vrot.slane %v1222, %v1230
  %v1234 = vsub.f32 %v1203, %v1227
  %v1235 = vsub.f32 %v1204, %v1231
  %v1236 = vmul.f32 %v1234, 1.442695
  %v1237 = vpow.pop %v1236
  %v1238 = vmul.f32 %v1235, 1.442695
  %v1239 = vpow.pop %v1238
  %1242 = vset.pattern.permute.xlu0 0
  %1243 = vperm.xlu0 %1242, %v1237
  %v1244 = vpop.permute.xlu0 %1243
  %1245 = vset.pattern.permute.xlu0 0
  %1246 = vperm.xlu0 %1245, %v1239
  %v1247 = vpop.permute.xlu0 %1246
  %v1248 = vlaneseq
  %v1249 = vshrl.u32 %v1248, 7
  %v1250 = vsub.s32 %v1208, %v1249
  %v1251 = vrot.slane %v1244, %v1250
  %v1252 = vlaneseq
  %v1253 = vshrl.u32 %v1252, 7
  %v1254 = vsub.s32 %v1208, %v1253
  %v1255 = vrot.slane %v1247, %v1254
  %v1256 = vsel %vm245, %v1255, %v1251
  %v1258 = vsel %vm1219, %v1256, 0.0
  %1259 = vadd.xlane.f32.xlu0 %v1258
  %v1260 = vpop.xlane.xlu0 %1259
  %v1261 = vrcp.pop %v1260
  %v1263 = vlaneseq
  %v1264 = vshrl.u32 %v1263, 7
  %v1265 = vsub.s32 0, %v1264
  %v1266 = vrot.slane %v1261, %v1265
  %v1267 = vlaneseq
  %v1268 = vshrl.u32 %v1267, 7
  %v1269 = vsub.s32 1, %v1268
  %v1270 = vrot.slane %v1261, %v1269
  %v1273 = vmul.f32 %v1237, %v1266
  %v1274 = vmul.f32 %v1239, %v1270
  %v1275 = vld [vmem:[%s2] sm:$0x3]
  %v1277 = vlaneseq
  %v1278 = vshrl.u32 %v1277, 7
  %v1279 = vsub.s32 0, %v1278
  %v1280 = vrot.slane %v1275, %v1279
  %1282 = vbcast.lane.b32.xlu0 %v1280, 256
  %v1283 = vpop.permute.xlu0 %1282
  %v1284 = vlaneseq
  %v1285 = vshrl.u32 %v1284, 7
  %v1286 = vsub.s32 1, %v1285
  %v1287 = vrot.slane %v1275, %v1286
  %1289 = vbcast.lane.b32.xlu0 %v1287, 256
  %v1290 = vpop.permute.xlu0 %1289
  %v1293 = vmul.f32 %v1273, %v1283
  %v1294 = vmul.f32 %v1274, %v1290
  %v1295 = vadd.f32 %v1293, 1e-20
  %v1296 = vadd.f32 %v1294, 1e-20
  %1299 = vset.pattern.permute.xlu0 0
  %1300 = vperm.xlu0 %1299, %v1295
  %v1301 = vpop.permute.xlu0 %1300
  %1302 = vset.pattern.permute.xlu0 0
  %1303 = vperm.xlu0 %1302, %v1296
  %v1304 = vpop.permute.xlu0 %1303
  %v1305 = vlaneseq
  %v1306 = vshrl.u32 %v1305, 7
  %v1307 = vsub.s32 %v1208, %v1306
  %v1308 = vrot.slane %v1301, %v1307
  %v1309 = vlaneseq
  %v1310 = vshrl.u32 %v1309, 7
  %v1311 = vsub.s32 %v1208, %v1310
  %v1312 = vrot.slane %v1304, %v1311
  %v1313 = vsel %vm245, %v1312, %v1308
  %v1315 = vsel %vm1219, %v1313, 0.0
  %1316 = vadd.xlane.f32.xlu0 %v1315
  %v1317 = vpop.xlane.xlu0 %1316
  %v1319 = vlaneseq
  %v1320 = vshrl.u32 %v1319, 7
  %v1321 = vsub.s32 0, %v1320
  %v1322 = vrot.slane %v1317, %v1321
  %v1323 = vlaneseq
  %v1324 = vshrl.u32 %v1323, 7
  %v1325 = vsub.s32 1, %v1324
  %v1326 = vrot.slane %v1317, %v1325
  %v1329 = vrcp.pop %v1322
  %v1330 = vmul.f32 %v1295, %v1329
  %v1331 = vrcp.pop %v1326
  %v1332 = vmul.f32 %v1296, %v1331
  %v1333 = vlog2.pop %v1295
  %v1334 = vmul.f32 %v1333, 0.6931472
  %v1335 = vlog2.pop %v1296
  %v1336 = vmul.f32 %v1335, 0.6931472
  %v1337 = vlog2.pop %v1317
  %v1338 = vmul.f32 %v1337, 0.6931472
  %v1340 = vlaneseq
  %v1341 = vshrl.u32 %v1340, 7
  %v1342 = vsub.s32 0, %v1341
  %v1343 = vrot.slane %v1338, %v1342
  %v1344 = vlaneseq
  %v1345 = vshrl.u32 %v1344, 7
  %v1346 = vsub.s32 1, %v1345
  %v1347 = vrot.slane %v1338, %v1346
  %v1350 = vsub.f32 %v1334, %v1343
  %v1351 = vsub.f32 %v1336, %v1347
  %v1352 = vmul.f32 %v1330, %v1350
  %v1353 = vmul.f32 %v1332, %v1351
  %1356 = vset.pattern.permute.xlu0 0
  %1357 = vperm.xlu0 %1356, %v1352
  %v1358 = vpop.permute.xlu0 %1357
  %1359 = vset.pattern.permute.xlu0 0
  %1360 = vperm.xlu0 %1359, %v1353
  %v1361 = vpop.permute.xlu0 %1360
  %v1362 = vlaneseq
  %v1363 = vshrl.u32 %v1362, 7
  %v1364 = vsub.s32 %v1208, %v1363
  %v1365 = vrot.slane %v1358, %v1364
  %v1366 = vlaneseq
  %v1367 = vshrl.u32 %v1366, 7
  %v1368 = vsub.s32 %v1208, %v1367
  %v1369 = vrot.slane %v1361, %v1368
  %v1370 = vsel %vm245, %v1369, %v1365
  %v1372 = vsel %vm1219, %v1370, 0.0
  %1373 = vadd.xlane.f32.xlu0 %v1372
  %v1374 = vpop.xlane.xlu0 %1373
  %v1375 = vsub.f32 0.0, %v1374
  %1378 = vset.pattern.permute.xlu0 0
  %1379 = vperm.xlu0 %1378, %v1350
  %v1380 = vpop.permute.xlu0 %1379
  %1381 = vset.pattern.permute.xlu0 0
  %1382 = vperm.xlu0 %1381, %v1351
  %v1383 = vpop.permute.xlu0 %1382
  %v1384 = vlaneseq
  %v1385 = vshrl.u32 %v1384, 7
  %v1386 = vsub.s32 %v1208, %v1385
  %v1387 = vrot.slane %v1380, %v1386
  %v1388 = vlaneseq
  %v1389 = vshrl.u32 %v1388, 7
  %v1390 = vsub.s32 %v1208, %v1389
  %v1391 = vrot.slane %v1383, %v1390
  %v1392 = vsel %vm245, %v1391, %v1387
  %v1394 = vsel %vm1219, %v1392, -inf
  %1395 = vmax.xlane.f32.xlu0 %v1394
  %v1396 = vpop.xlane.xlu0 %1395
  %v1398 = vlaneseq
  %v1399 = vshrl.u32 %v1398, 7
  %v1400 = vsub.s32 0, %v1399
  %v1401 = vrot.slane %v1396, %v1400
  %v1402 = vlaneseq
  %v1403 = vshrl.u32 %v1402, 7
  %v1404 = vsub.s32 1, %v1403
  %v1405 = vrot.slane %v1396, %v1404
  %vm1408 = vcmp.eq.f32.partialorder %v1350, %v1401
  %vm1409 = vcmp.eq.f32.partialorder %v1351, %v1405
  %1411 = vbcast.lane.b32.xlu0 %v1208, 256
  %v1412 = vpop.permute.xlu0 %1411
  %v1413 = vsel %vm1408, %v1412, 3
  %v1414 = vsel %vm1409, %v1412, 3
  %1415 = vset.pattern.permute.xlu0 0
  %1416 = vperm.xlu0 %1415, %v1413
  %v1417 = vpop.permute.xlu0 %1416
  %1418 = vset.pattern.permute.xlu0 0
  %1419 = vperm.xlu0 %1418, %v1414
  %v1420 = vpop.permute.xlu0 %1419
  %v1421 = vlaneseq
  %v1422 = vshrl.u32 %v1421, 7
  %v1423 = vsub.s32 %v1208, %v1422
  %v1424 = vrot.slane %v1417, %v1423
  %v1425 = vlaneseq
  %v1426 = vshrl.u32 %v1425, 7
  %v1427 = vsub.s32 %v1208, %v1426
  %v1428 = vrot.slane %v1420, %v1427
  %v1429 = vsel %vm245, %v1428, %v1424
  %v1430 = vsel %vm1219, %v1429, 2147483647
  %v1431 = vand.u32 %v1430, 65535
  %v1432 = vshra.s32 %v1430, 16
  %v1433 = vcvt.s32.f32 %v1431
  %v1434 = vcvt.s32.f32 %v1432
  %1435 = vmin.xlane.f32.xlu0 %v1434
  %v1436 = vpop.xlane.xlu0 %1435
  %vm1437 = vcmp.eq.f32.partialorder %v1434, %v1436
  %v1438 = vsel %vm1437, %v1433, inf
  %1439 = vmin.xlane.f32.xlu0 %v1438
  %v1440 = vpop.xlane.xlu0 %1439
  %v1441 = vcvt.f32.s32 %v1440
  %v1442 = vcvt.f32.s32 %v1436
  %v1443 = vshll.u32 %v1442, 16
  %v1444 = vadd.s32 %v1443, %v1441
  %vm1445 = vcmp.lt.s32.totalorder %v1444, 2
  %v1446 = vsel %vm1445, %v1444, 2
  %v1447 = vcvt.s32.f32 %v1446
  %1450 = vset.pattern.permute.xlu0 0
  %1451 = vperm.xlu0 %1450, %v1330
  %v1452 = vpop.permute.xlu0 %1451
  %1453 = vset.pattern.permute.xlu0 0
  %1454 = vperm.xlu0 %1453, %v1332
  %v1455 = vpop.permute.xlu0 %1454
  %v1456 = vadd.s32 %v1208, 4294967264
  %v1457 = vlaneseq
  %v1458 = vshrl.u32 %v1457, 7
  %v1459 = vsub.s32 %v1456, %v1458
  %v1460 = vrot.slane %v1452, %v1459
  %v1461 = vlaneseq
  %v1462 = vshrl.u32 %v1461, 7
  %v1463 = vsub.s32 %v1456, %v1462
  %v1464 = vrot.slane %v1455, %v1463
  %v1465 = vsel %vm245, %v1464, %v1460
  %v1467 = vsel %vm158, %v1035, %v1465
  %vm1468 = vcmask 285696
  %v1469 = vsel %vm1468, %v1467, %v1375
  %vm1470 = vcmask 293888
  %v1471 = vsel %vm1470, %v1469, %v1447
  %vm1472 = vcmask 302080
  %v1473 = vsel %vm1472, %v1471, %v1396
  %vm1474 = vcmask 310272
  %v1475 = vsel %vm1474, %v1473, 0.0
  %1476 = vst [vmem:[%s16] sm:$0x3] %v1475
  // Predicated region
  $region66: #{_lambda_.1} parent=0 // pred_check
    _
  $region67: #{_lambda_.1} parent=0 // pred_check_branch
    %1478 = sbr.rel (0) target = $region69
  $region68: #{_lambda_.1} parent=0 // pred_region
    _
  $region69: #{_lambda_.1} parent=0 // pred_fallthru
    _
  // Predicated region
  $region70: #{_lambda_.1} parent=0 // pred_check
    _
  $region71: #{_lambda_.1} parent=0 // pred_check_branch
    %1480 = sbr.rel (0) target = $region73
  $region72: #{_lambda_.1} parent=0 // pred_region
    _
  $region73: #{_lambda_.1} parent=0 // pred_fallthru
    _

</llo_original>
